<compile_context>
chip_gen: v5e
topology: v5e:2x2
jax: 0.10.0
libtpu: 0.0.40
codegen_flags: <defaults>
</compile_context>

<pallas_src>
import functools

import jax
import jax.numpy as jnp
from jax import lax
from jax.experimental import pallas as pl
from jax.experimental.pallas import tpu as pltpu


def _painn_pairs_kernel(src_ref, wij_ref, dir_ref, idxi_ref, idxj_ref, out_ref,
                        *, n_atom_basis, pair_dtype):
    """One pair-tile step: gather -> filter -> scatter-add into resident delta."""
    F = n_atom_basis
    N = src_ref.shape[0]
    TP = wij_ref.shape[0]

    # Zero the resident (N, 4F) delta accumulator at the first tile of this split.
    @pl.when(pl.program_id(1) == 0)
    def _init():
        out_ref[...] = jnp.zeros_like(out_ref)

    # (N, TP) one-hot gather / scatter matrices from lane-dense (1, TP) index
    # rows (sublane-broadcast compare). idx == -1 (padding) -> all-zero column.
    rows = lax.broadcasted_iota(jnp.int32, (N, TP), 0)
    e_j = (idxj_ref[...] == rows).astype(pair_dtype)          # gather  (N, TP)
    e_i = (idxi_ref[...] == rows).astype(pair_dtype)          # scatter (N, TP)

    # ONE wide gather: contract the atom axis -> (TP, 6F) = [x_j | mu_j], f32 acc.
    gathered = lax.dot_general(e_j, src_ref[...],
                               (((0,), (0,)), ((), ())),
                               preferred_element_type=jnp.float32)
    xj = gathered[:, :3 * F]                                   # (TP, 3F)
    muj = gathered[:, 3 * F:]                                  # (TP, 3F)

    # Filter (bf16 Wij stream x f32 gathered features, f32 math).
    xw = wij_ref[...].astype(jnp.float32) * xj                 # (TP, 3F)
    dq_p = xw[:, :F]
    dmuR_p = xw[:, F:2 * F]
    dmumu_p = xw[:, 2 * F:]

    dirs = dir_ref[...]                                        # (TP, 8) f32, lanes 0..2 used
    slab = [dq_p]
    for d in range(3):
        slab.append(dmuR_p * dirs[:, d:d + 1] + dmumu_p * muj[:, d * F:(d + 1) * F])
    pair_slab = jnp.concatenate(slab, axis=1).astype(pair_dtype)   # (TP, 4F)

    # ONE wide scatter-add: (N, TP) @ (TP, 4F) -> (N, 4F), f32 accumulation.
    out_ref[...] += jnp.dot(e_i, pair_slab, preferred_element_type=jnp.float32)


def painn_interaction(q, mu, Wij, dir_ij, idx_i, idx_j, params, *,
                      tile_pairs=512, num_splits=1, pair_dtype=jnp.bfloat16):
    """q:(N,1,F) mu:(N,3,F) Wij:(P,1,3F) dir_ij:(P,3) idx_*:(P,) -> (q', mu').

    pair_dtype controls the streamed Wij / gather-source / one-hot operand dtype
    (bf16 default: native MXU, half the HBM stream; accumulation is always f32).
    num_splits > 1 splits the pair axis across a leading "parallel" grid axis
    (dual-TensorCore v7x) with per-split partial accumulators summed here.
    """
    N, _, F = q.shape
    P = Wij.shape[0]
    w1, b1, w2, b2 = params

    q2 = q.reshape(N, F).astype(jnp.float32)
    mu2 = mu.reshape(N, 3 * F).astype(jnp.float32)             # [mu_x | mu_y | mu_z]

    # ---- hoisted per-atom MLP (runs once, plain XLA; off the pair loop) ----
    h = jax.nn.silu(q2 @ w1.astype(jnp.float32) + b1.astype(jnp.float32).reshape(1, F))
    x = h @ w2.astype(jnp.float32) + b2.astype(jnp.float32).reshape(1, 3 * F)
    src = jnp.concatenate([x, mu2], axis=1).astype(pair_dtype)  # (N, 6F) gather source

    # ---- pair-axis padding / layouts ----
    TP = int(tile_pairs)
    S = int(num_splits)
    chunk = TP * S
    P_pad = ((P + chunk - 1) // chunk) * chunk
    pad = P_pad - P
    tiles_per_split = P_pad // chunk

    wij2 = jnp.pad(Wij.reshape(P, 3 * F), ((0, pad), (0, 0))).astype(pair_dtype)
    dir2 = jnp.pad(dir_ij.astype(jnp.float32), ((0, pad), (0, 5)))      # (P_pad, 8)
    idx_i2 = jnp.pad(idx_i.astype(jnp.int32), (0, pad),
                     constant_values=-1)[None, :]                       # (1, P_pad)
    idx_j2 = jnp.pad(idx_j.astype(jnp.int32), (0, pad),
                     constant_values=-1)[None, :]                       # (1, P_pad)

    def pair_block(s, p):
        return (s * tiles_per_split + p, 0)

    def idx_block(s, p):
        return (0, s * tiles_per_split + p)

    # VMEM budget derived from the actual generation (v7x has 64 MiB, not 128).
    try:
        vmem_cap = pltpu.get_tpu_info().vmem_capacity_bytes
    except Exception:
        vmem_cap = 128 * 1024 * 1024
    vmem_limit = int(min(vmem_cap // 2, 64 * 1024 * 1024))

    partial = pl.pallas_call(
        functools.partial(_painn_pairs_kernel, n_atom_basis=F, pair_dtype=pair_dtype),
        out_shape=jax.ShapeDtypeStruct((S, N, 4 * F), jnp.float32),
        grid=(S, tiles_per_split),
        in_specs=[
            pl.BlockSpec((N, 6 * F), lambda s, p: (0, 0)),   # src [x|mu]   (resident)
            pl.BlockSpec((TP, 3 * F), pair_block),           # Wij          (streamed, pair_dtype)
            pl.BlockSpec((TP, 8), pair_block),               # dir_ij       (streamed, f32)
            pl.BlockSpec((1, TP), idx_block),                # idx_i        (streamed)
            pl.BlockSpec((1, TP), idx_block),                # idx_j        (streamed)
        ],
        out_specs=pl.BlockSpec((None, N, 4 * F), lambda s, p: (s, 0, 0)),
        compiler_params=pltpu.CompilerParams(
            dimension_semantics=("parallel", "arbitrary"),
            vmem_limit_bytes=vmem_limit,
        ),
    )(src, wij2, dir2, idx_i2, idx_j2)

    # Sum per-split partial deltas and add the residual [q | mu] (exact, f32).
    total = jnp.sum(partial, axis=0) + jnp.concatenate([q2, mu2], axis=1)
    q_out = total[:, :F].reshape(N, 1, F)
    mu_out = total[:, F:].reshape(N, 3, F)
    return q_out, mu_out


def painn_interaction_ref(q, mu, Wij, dir_ij, idx_i, idx_j, params):
    """Pure-JAX reference mirroring the PyTorch forward."""
    w1, b1, w2, b2 = params
    x = jax.nn.silu(q @ w1 + b1) @ w2 + b2              # (N, 1, 3F)
    xj = x[idx_j]                                       # (P, 1, 3F)
    muj = mu[idx_j]                                     # (P, 3, F)
    xw = Wij * xj                                       # (P, 1, 3F)
    dq, dmuR, dmumu = jnp.split(xw, 3, axis=-1)         # each (P, 1, F)
    dq = jax.ops.segment_sum(dq, idx_i, num_segments=q.shape[0])
    dmu = dmuR * dir_ij[..., None] + dmumu * muj        # (P, 3, F)
    dmu = jax.ops.segment_sum(dmu, idx_i, num_segments=q.shape[0])
    return q + dq, mu + dmu


if __name__ == "__main__":
    N_ATOMS = 16
    N_PAIRS = 700        # not a multiple of tile_pairs -> exercises the padding path
    F = 128              # n_atom_basis (lane-aligned)

    key = jax.random.PRNGKey(0)
    ks = jax.random.split(key, 8)

    # Deterministic synthetic parameters (snn.Dense == Linear).
    w1 = jax.random.normal(ks[0], (F, F), jnp.float32) / jnp.sqrt(F)
    b1 = jnp.zeros((F,), jnp.float32)
    w2 = jax.random.normal(ks[1], (F, 3 * F), jnp.float32) / jnp.sqrt(F)
    b2 = jnp.zeros((3 * F,), jnp.float32)
    params = (w1, b1, w2, b2)

    # Deterministic synthetic inputs.
    q = jax.random.normal(ks[2], (N_ATOMS, 1, F), jnp.float32)
    mu = jax.random.normal(ks[3], (N_ATOMS, 3, F), jnp.float32)
    Wij = jax.random.normal(ks[4], (N_PAIRS, 1, 3 * F), jnp.float32)
    dvec = jax.random.normal(ks[5], (N_PAIRS, 3), jnp.float32)
    dir_ij = dvec / jnp.linalg.norm(dvec, axis=-1, keepdims=True)
    idx_i = jax.random.randint(ks[6], (N_PAIRS,), 0, N_ATOMS, jnp.int32)
    idx_j = jax.random.randint(ks[7], (N_PAIRS,), 0, N_ATOMS, jnp.int32)

    q_exp, mu_exp = painn_interaction_ref(q, mu, Wij, dir_ij, idx_i, idx_j, params)

    # 1) f32 path (exact up to summation order); small TP exercises multi-tile accumulation.
    q_f32, mu_f32 = painn_interaction(q, mu, Wij, dir_ij, idx_i, idx_j, params,
                                      tile_pairs=128, num_splits=1,
                                      pair_dtype=jnp.float32)
    jax.block_until_ready((q_f32, mu_f32))
    assert jnp.allclose(q_f32, q_exp, atol=2e-3, rtol=2e-3)
    assert jnp.allclose(mu_f32, mu_exp, atol=2e-3, rtol=2e-3)

    # 2) Default path: bf16 streamed Wij / src / one-hots, TP=512, f32 accumulation.
    q_bf, mu_bf = painn_interaction(q, mu, Wij, dir_ij, idx_i, idx_j, params)
    jax.block_until_ready((q_bf, mu_bf))
    assert jnp.allclose(q_bf, q_exp, atol=2e-1, rtol=5e-2)
    assert jnp.allclose(mu_bf, mu_exp, atol=2e-1, rtol=5e-2)

    # 3) Dual-core pair split (v7x): per-split partial accumulators summed in the wrapper.
    q_sp, mu_sp = painn_interaction(q, mu, Wij, dir_ij, idx_i, idx_j, params,
                                    tile_pairs=256, num_splits=2,
                                    pair_dtype=jnp.bfloat16)
    jax.block_until_ready((q_sp, mu_sp))
    assert jnp.allclose(q_sp, q_exp, atol=2e-1, rtol=5e-2)
    assert jnp.allclose(mu_sp, mu_exp, atol=2e-1, rtol=5e-2)

    print("KERNEL_OK")
</pallas_src>

<mosaic_0001>
module attributes {stable_mosaic.version = 11 : i64} {
  func.func @_painn_pairs_kernel(%arg0: i32, %arg1: i32, %arg2: memref<16x768xf32, #tpu.memory_space<vmem>>, %arg3: memref<128x384xf32, #tpu.memory_space<vmem>>, %arg4: memref<128x8xf32, #tpu.memory_space<vmem>>, %arg5: memref<1x128xi32, #tpu.memory_space<vmem>>, %arg6: memref<1x128xi32, #tpu.memory_space<vmem>>, %arg7: memref<1x16x512xf32, #tpu.memory_space<vmem>>) attributes {dimension_semantics = [#tpu.dimension_semantics<parallel>, #tpu.dimension_semantics<arbitrary>], iteration_bounds = array<i64: 1, 6>, scalar_prefetch = 0 : i64, scratch_operands = 0 : i64, tpu.core_type = #tpu.core_type<tc>, window_params = [{pipeline_mode = #tpu.pipeline_mode<synchronous>, transform_indices = @transform_0, window_bounds = array<i64: 16, 768>}, {transform_indices = @transform_1, window_bounds = array<i64: 128, 384>}, {transform_indices = @transform_2, window_bounds = array<i64: 128, 8>}, {transform_indices = @transform_3, window_bounds = array<i64: 1, 128>}, {transform_indices = @transform_4, window_bounds = array<i64: 1, 128>}, {transform_indices = @transform_5, window_bounds = array<i64: 1, 16, 512>}]} {
    %c0_i32 = arith.constant 0 : i32
    %0 = arith.cmpi eq, %arg1, %c0_i32 : i32
    %1 = arith.extui %0 : i1 to i32
    %c0_i32_0 = arith.constant 0 : i32
    %2 = arith.cmpi ne, %1, %c0_i32_0 : i32
    scf.if %2 {
      %cst_17 = arith.constant 0.000000e+00 : f32
      %50 = vector.broadcast %cst_17 : f32 to vector<16x512xf32>
      %c0_18 = arith.constant 0 : index
      %c0_19 = arith.constant 0 : index
      %c0_20 = arith.constant 0 : index
      %51 = vector.load %arg7[%c0_18, %c0_19, %c0_20] : memref<1x16x512xf32, #tpu.memory_space<vmem>>, vector<1x16x512xf32>
      %52 = vector.shape_cast %51 : vector<1x16x512xf32> to vector<16x512xf32>
      %53 = vector.shape_cast %50 : vector<16x512xf32> to vector<1x16x512xf32>
      tpu.vector_store %arg7[%c0_18, %c0_19, %c0_20], %53 {strides = array<i32>} : memref<1x16x512xf32, #tpu.memory_space<vmem>>, vector<1x16x512xf32>,
    } else {
    }
    %3 = tpu.iota {dimensions = array<i32: 0>} : vector<16x128xi32>
    %c0 = arith.constant 0 : index
    %c0_1 = arith.constant 0 : index
    %4 = vector.load %arg6[%c0, %c0_1] : memref<1x128xi32, #tpu.memory_space<vmem>>, vector<1x128xi32>
    %5 = vector.broadcast %4 : vector<1x128xi32> to vector<16x128xi32>
    %6 = arith.cmpi eq, %5, %3 : vector<16x128xi32>
    %7 = arith.extui %6 : vector<16x128xi1> to vector<16x128xi32>
    %8 = arith.sitofp %7 : vector<16x128xi32> to vector<16x128xf32>
    %c0_2 = arith.constant 0 : index
    %c0_3 = arith.constant 0 : index
    %9 = vector.load %arg5[%c0_2, %c0_3] : memref<1x128xi32, #tpu.memory_space<vmem>>, vector<1x128xi32>
    %10 = vector.broadcast %9 : vector<1x128xi32> to vector<16x128xi32>
    %11 = arith.cmpi eq, %10, %3 : vector<16x128xi32>
    %12 = arith.extui %11 : vector<16x128xi1> to vector<16x128xi32>
    %13 = arith.sitofp %12 : vector<16x128xi32> to vector<16x128xf32>
    %c0_4 = arith.constant 0 : index
    %c0_5 = arith.constant 0 : index
    %14 = vector.load %arg2[%c0_4, %c0_5] : memref<16x768xf32, #tpu.memory_space<vmem>>, vector<16x768xf32>
    %cst = arith.constant dense<0.000000e+00> : vector<128x768xf32>
    %15 = tpu.matmul %8, %14, %cst {dimension_numbers = #tpu.dot_dimension_numbers<[0], [0], [1], [1], [0, 1, 1, 1], [], []>} : vector<16x128xf32>, vector<16x768xf32>, vector<128x768xf32> -> vector<128x768xf32>
    %16 = vector.extract_strided_slice %15 {offsets = [0, 0], sizes = [128, 384], strides = [1, 1]} : vector<128x768xf32> to vector<128x384xf32>
    %17 = vector.extract_strided_slice %15 {offsets = [0, 384], sizes = [128, 384], strides = [1, 1]} : vector<128x768xf32> to vector<128x384xf32>
    %c0_6 = arith.constant 0 : index
    %c0_7 = arith.constant 0 : index
    %18 = vector.load %arg3[%c0_6, %c0_7] : memref<128x384xf32, #tpu.memory_space<vmem>>, vector<128x384xf32>
    %19 = arith.mulf %18, %16 : vector<128x384xf32>
    %20 = vector.extract_strided_slice %19 {offsets = [0, 0], sizes = [128, 128], strides = [1, 1]} : vector<128x384xf32> to vector<128x128xf32>
    %21 = vector.extract_strided_slice %19 {offsets = [0, 128], sizes = [128, 128], strides = [1, 1]} : vector<128x384xf32> to vector<128x128xf32>
    %22 = vector.extract_strided_slice %19 {offsets = [0, 256], sizes = [128, 128], strides = [1, 1]} : vector<128x384xf32> to vector<128x128xf32>
    %c0_8 = arith.constant 0 : index
    %c0_9 = arith.constant 0 : index
    %23 = vector.load %arg4[%c0_8, %c0_9] : memref<128x8xf32, #tpu.memory_space<vmem>>, vector<128x8xf32>
    %24 = vector.extract_strided_slice %23 {offsets = [0, 0], sizes = [128, 1], strides = [1, 1]} : vector<128x8xf32> to vector<128x1xf32>
    %25 = vector.broadcast %24 : vector<128x1xf32> to vector<128x128xf32>
    %26 = arith.mulf %21, %25 : vector<128x128xf32>
    %27 = vector.extract_strided_slice %17 {offsets = [0, 0], sizes = [128, 128], strides = [1, 1]} : vector<128x384xf32> to vector<128x128xf32>
    %28 = arith.mulf %22, %27 : vector<128x128xf32>
    %29 = arith.addf %26, %28 : vector<128x128xf32>
    %30 = vector.extract_strided_slice %23 {offsets = [0, 1], sizes = [128, 1], strides = [1, 1]} : vector<128x8xf32> to vector<128x1xf32>
    %31 = vector.broadcast %30 : vector<128x1xf32> to vector<128x128xf32>
    %32 = arith.mulf %21, %31 : vector<128x128xf32>
    %33 = vector.extract_strided_slice %17 {offsets = [0, 128], sizes = [128, 128], strides = [1, 1]} : vector<128x384xf32> to vector<128x128xf32>
    %34 = arith.mulf %22, %33 : vector<128x128xf32>
    %35 = arith.addf %32, %34 : vector<128x128xf32>
    %36 = vector.extract_strided_slice %23 {offsets = [0, 2], sizes = [128, 1], strides = [1, 1]} : vector<128x8xf32> to vector<128x1xf32>
    %37 = vector.broadcast %36 : vector<128x1xf32> to vector<128x128xf32>
    %38 = arith.mulf %21, %37 : vector<128x128xf32>
    %39 = vector.extract_strided_slice %17 {offsets = [0, 256], sizes = [128, 128], strides = [1, 1]} : vector<128x384xf32> to vector<128x128xf32>
    %40 = arith.mulf %22, %39 : vector<128x128xf32>
    %41 = arith.addf %38, %40 : vector<128x128xf32>
    %42 = tpu.concatenate %20, %29, %35, %41 in 1 : vector<128x128xf32>, vector<128x128xf32>, vector<128x128xf32>, vector<128x128xf32> -> vector<128x512xf32>
    %c0_10 = arith.constant 0 : index
    %c0_11 = arith.constant 0 : index
    %c0_12 = arith.constant 0 : index
    %43 = vector.load %arg7[%c0_10, %c0_11, %c0_12] : memref<1x16x512xf32, #tpu.memory_space<vmem>>, vector<1x16x512xf32>
    %44 = vector.shape_cast %43 : vector<1x16x512xf32> to vector<16x512xf32>
    %cst_13 = arith.constant dense<0.000000e+00> : vector<16x512xf32>
    %45 = tpu.matmul %13, %42, %cst_13 {dimension_numbers = #tpu.dot_dimension_numbers<[1], [0], [0], [1], [0, 0, 1, 1], [], []>} : vector<16x128xf32>, vector<128x512xf32>, vector<16x512xf32> -> vector<16x512xf32>
    %46 = arith.addf %44, %45 : vector<16x512xf32>
    %c0_14 = arith.constant 0 : index
    %c0_15 = arith.constant 0 : index
    %c0_16 = arith.constant 0 : index
    %47 = vector.load %arg7[%c0_14, %c0_15, %c0_16] : memref<1x16x512xf32, #tpu.memory_space<vmem>>, vector<1x16x512xf32>
    %48 = vector.shape_cast %47 : vector<1x16x512xf32> to vector<16x512xf32>
    %49 = vector.shape_cast %46 : vector<16x512xf32> to vector<1x16x512xf32>
    tpu.vector_store %arg7[%c0_14, %c0_15, %c0_16], %49 {strides = array<i32>} : memref<1x16x512xf32, #tpu.memory_space<vmem>>, vector<1x16x512xf32>,
    return
  }
  func.func @transform_0(%arg0: i32, %arg1: i32) -> (i32, i32) {
    %c0_i32 = arith.constant 0 : i32
    %c0_i32_0 = arith.constant 0 : i32
    %c0_i32_1 = arith.constant 0 : i32
    return %c0_i32, %c0_i32_0 : i32, i32
  }
  func.func @transform_1(%arg0: i32, %arg1: i32) -> (i32, i32) {
    %c6_i32 = arith.constant 6 : i32
    %0 = arith.muli %arg0, %c6_i32 : i32
    %1 = arith.addi %0, %arg1 : i32
    %c0_i32 = arith.constant 0 : i32
    %c0_i32_0 = arith.constant 0 : i32
    return %1, %c0_i32 : i32, i32
  }
  func.func @transform_2(%arg0: i32, %arg1: i32) -> (i32, i32) {
    %c6_i32 = arith.constant 6 : i32
    %0 = arith.muli %arg0, %c6_i32 : i32
    %1 = arith.addi %0, %arg1 : i32
    %c0_i32 = arith.constant 0 : i32
    %c0_i32_0 = arith.constant 0 : i32
    return %1, %c0_i32 : i32, i32
  }
  func.func @transform_3(%arg0: i32, %arg1: i32) -> (i32, i32) {
    %c6_i32 = arith.constant 6 : i32
    %0 = arith.muli %arg0, %c6_i32 : i32
    %1 = arith.addi %0, %arg1 : i32
    %c0_i32 = arith.constant 0 : i32
    %c0_i32_0 = arith.constant 0 : i32
    return %c0_i32, %1 : i32, i32
  }
  func.func @transform_4(%arg0: i32, %arg1: i32) -> (i32, i32) {
    %c6_i32 = arith.constant 6 : i32
    %0 = arith.muli %arg0, %c6_i32 : i32
    %1 = arith.addi %0, %arg1 : i32
    %c0_i32 = arith.constant 0 : i32
    %c0_i32_0 = arith.constant 0 : i32
    return %c0_i32, %1 : i32, i32
  }
  func.func @transform_5(%arg0: i32, %arg1: i32) -> (i32, i32, i32) {
    %c0_i32 = arith.constant 0 : i32
    %c0_i32_0 = arith.constant 0 : i32
    %c0_i32_1 = arith.constant 0 : i32
    return %arg0, %c0_i32, %c0_i32_0 : i32, i32, i32
  }
}

</mosaic_0001>

<llo_original>
// kernel: tpu_custom_call.1
$region0: #{tpu_custom_call.1}
  #allocation0 [shape = 'u32[]', space=smem, size = 0x4, offset = 0x4, fixed_abs, tag = 'smem constant byte address 0x4 - core index']
  #allocation1 [shape = 'u32[72,128]{1,0:T(1,128)}', space=vmem, size = 0x9000, scoped, tag = 'internal scratch']
  %s0 = inlined_call_operand.hbm [shape: f32[16,768], index: 0, kind: input, shape index: {}]
  %s1 = inlined_call_operand.hbm [shape: f32[768,384], index: 1, kind: input, shape index: {}]
  %s2 = inlined_call_operand.vmem [shape: f32[768,8], index: 2, kind: input, shape index: {}]
  %s3 = inlined_call_operand.hbm [shape: s32[1,768], index: 3, kind: input, shape index: {}]
  %s4 = inlined_call_operand.hbm [shape: s32[1,768], index: 4, kind: input, shape index: {}]
  %s5 = inlined_call_operand.hbm [shape: f32[1,16,512], index: 5, kind: output, shape index: {}]
  %s6 = sld [smem:[#allocation0]]
  $region73: #{tpu_custom_call.1} parent=0
    _
  %s8 = ssub.s32 1, %s6
  %s9 = scalar_select 0, %s8, %s6
  $region1: #{tpu_custom_call.1} parent=0
    #allocation2 [shape = 'u8[49152]{0}', space=vmem, size = 0xc000, scoped, tag = 'input window, operand 0, single buffered']
    #allocation3 [shape = 's32[2]{0}', space=sflag, size = 0x8, scoped, tag = 'scoped memory for tpu_custom_call.1']
    #allocation4 [shape = 's32[2]{0}', space=sflag, size = 0x8, scoped, tag = 'scoped memory for tpu_custom_call.1']
    #allocation5 [shape = 'u8[393216]{0}', space=vmem, size = 0x60000, scoped, tag = 'input window, operand 1']
    #allocation6 [shape = 's32[2]{0}', space=sflag, size = 0x8, scoped, tag = 'scoped memory for tpu_custom_call.1']
    #allocation7 [shape = 'u8[1024]{0}', space=vmem, size = 0x400, scoped, tag = 'input window, operand 3']
    #allocation8 [shape = 'u8[1024]{0}', space=vmem, size = 0x400, scoped, tag = 'input window, operand 4']
    #allocation9 [shape = 's32[2]{0}', space=sflag, size = 0x8, scoped, tag = 'scoped memory for tpu_custom_call.1']
    #allocation10 [shape = 'u8[32768]{0}', space=vmem, size = 0x8000, scoped, tag = 'output window, operand 0, single buffered']
    %10 = vsyncpa [#allocation3], 0
    %11 = vsyncpa [#allocation6], 0
    %s12 = scalar_lea.sflag [#allocation6], 1
    %13 = vsyncpa %s12, 0
    %14 = vsyncpa [#allocation9], 0
    %s15 = scalar_lea.sflag [#allocation9], 1
    %16 = vsyncpa %s15, 0
    %17 = vsyncpa [#allocation4], 0
    loop: start=0, step=1, limit=8
    $region2: #{tpu_custom_call.1} parent=1 // loop_pre_header
      _
    $region3: #{tpu_custom_call.1} parent=1 // loop_header
      %s19 = sphi 0, %s23
      %p20 = scmp.ge.s32.totalorder %s19, 8
      %s26 = sphi 0, %s38
      %s27 = sphi 0, %s34
      %s28 = sphi 0, %s26
      %s29 = sphi 0, %s27
      %s30 = sphi 0, %s28
      %s31 = sphi 0, %s29
      %s39 = sphi 0, %s39
      %s41 = sphi 0, %s39
      %s42 = sphi 0, %s41
      %s56 = sphi 0, %s42
      %s66 = sphi 0, %s68
      %s69 = sphi 0, %s66
      %s70 = sphi 0, %s69
      %s86 = sphi 0, %s70
      %s96 = sphi 0, %s98
      %s99 = sphi 0, %s96
      %s100 = sphi 0, %s99
      %s116 = sphi 0, %s100
      %s126 = sphi 0, %s128
      %s129 = sphi 0, %s126
      %s130 = sphi 0, %s129
      %s146 = sphi 0, %s130
      %s156 = sphi 0, %s158
      %s159 = sphi 0, %s156
      %s160 = sphi 0, %s159
      %s176 = sphi 0, %s160
      %s182 = sphi 0, %s184
      %s185 = sphi 0, %s182
      %s186 = sphi 0, %s185
      %s202 = sphi 0, %s186
    $region4: #{tpu_custom_call.1} parent=1 // loop_header_branch
      %22 = sbr.rel (%p20) target = $region8
    $region5: #{tpu_custom_call.1} parent=1 // loop_body
      %s24 = ssub.s32 %s19, 1
      %s25 = ssub.s32 %s19, 2
      %s32 = sadd.s32 1, %s27
      %p33 = scmp.ge.s32.totalorder %s32, 6
      %s34 = scalar_select %p33, 0, %s32
      %s35 = sadd.s32 1, %s26
      %s36 = scalar_select %p33, %s35, %s26
      %p37 = scmp.ge.s32.totalorder %s36, 1
      %s38 = scalar_select %p37, 0, %s36
      %s40 = sadd.s32 %s39, 1
      %p43 = scmp.eq.s32.totalorder %s19, 5
      %p44 = scmp.ne.s32.totalorder %s39, %s41
      %p45 = scmp.eq.s32.totalorder %s19, 0
      %p46 = por %p44, %p45
      %p47 = scmp.ne.s32.totalorder %s39, %s41
      %p48 = scmp.eq.s32.totalorder %s24, 5
      %p49 = por %p47, %p48
      %p50 = scmp.ne.s32.totalorder %s41, %s42
      %p51 = scmp.eq.s32.totalorder %s24, 0
      %p52 = por %p50, %p51
      %p53 = scmp.ne.s32.totalorder %s41, %s42
      %p54 = scmp.eq.s32.totalorder %s25, 5
      %p55 = por %p53, %p54
      %p57 = scmp.ne.s32.totalorder %s42, %s56
      %p58 = scmp.eq.s32.totalorder %s25, 0
      %p59 = por %p57, %p58
      %s60 = smul.u32 %s26, 6
      %s61 = sadd.s32 %s60, %s27
      %s62 = smul.u32 %s38, 6
      %s63 = sadd.s32 %s62, %s34
      %s64 = ssub.s32 %s61, %s63
      %p65 = scmp.eq.s32.totalorder %s64, 0
      %s67 = sadd.s32 %s66, 1
      %s68 = scalar_select %p65, %s66, %s67
      %p71 = pneg %p65
      %p72 = scmp.eq.s32.totalorder %s19, 5
      %p73 = por %p71, %p72
      %p74 = scmp.ne.s32.totalorder %s66, %s69
      %p75 = scmp.eq.s32.totalorder %s19, 0
      %p76 = por %p74, %p75
      %p77 = scmp.ne.s32.totalorder %s66, %s69
      %p78 = scmp.eq.s32.totalorder %s24, 5
      %p79 = por %p77, %p78
      %p80 = scmp.ne.s32.totalorder %s69, %s70
      %p81 = scmp.eq.s32.totalorder %s24, 0
      %p82 = por %p80, %p81
      %p83 = scmp.ne.s32.totalorder %s69, %s70
      %p84 = scmp.eq.s32.totalorder %s25, 5
      %p85 = por %p83, %p84
      %p87 = scmp.ne.s32.totalorder %s70, %s86
      %p88 = scmp.eq.s32.totalorder %s25, 0
      %p89 = por %p87, %p88
      %s90 = smul.u32 %s26, 6
      %s91 = sadd.s32 %s90, %s27
      %s92 = smul.u32 %s38, 6
      %s93 = sadd.s32 %s92, %s34
      %s94 = ssub.s32 %s91, %s93
      %p95 = scmp.eq.s32.totalorder %s94, 0
      %s97 = sadd.s32 %s96, 1
      %s98 = scalar_select %p95, %s96, %s97
      %p101 = pneg %p95
      %p102 = scmp.eq.s32.totalorder %s19, 5
      %p103 = por %p101, %p102
      %p104 = scmp.ne.s32.totalorder %s96, %s99
      %p105 = scmp.eq.s32.totalorder %s19, 0
      %p106 = por %p104, %p105
      %p107 = scmp.ne.s32.totalorder %s96, %s99
      %p108 = scmp.eq.s32.totalorder %s24, 5
      %p109 = por %p107, %p108
      %p110 = scmp.ne.s32.totalorder %s99, %s100
      %p111 = scmp.eq.s32.totalorder %s24, 0
      %p112 = por %p110, %p111
      %p113 = scmp.ne.s32.totalorder %s99, %s100
      %p114 = scmp.eq.s32.totalorder %s25, 5
      %p115 = por %p113, %p114
      %p117 = scmp.ne.s32.totalorder %s100, %s116
      %p118 = scmp.eq.s32.totalorder %s25, 0
      %p119 = por %p117, %p118
      %s120 = smul.u32 %s26, 6
      %s121 = sadd.s32 %s120, %s27
      %s122 = smul.u32 %s38, 6
      %s123 = sadd.s32 %s122, %s34
      %s124 = ssub.s32 %s121, %s123
      %p125 = scmp.eq.s32.totalorder %s124, 0
      %s127 = sadd.s32 %s126, 1
      %s128 = scalar_select %p125, %s126, %s127
      %p131 = pneg %p125
      %p132 = scmp.eq.s32.totalorder %s19, 5
      %p133 = por %p131, %p132
      %p134 = scmp.ne.s32.totalorder %s126, %s129
      %p135 = scmp.eq.s32.totalorder %s19, 0
      %p136 = por %p134, %p135
      %p137 = scmp.ne.s32.totalorder %s126, %s129
      %p138 = scmp.eq.s32.totalorder %s24, 5
      %p139 = por %p137, %p138
      %p140 = scmp.ne.s32.totalorder %s129, %s130
      %p141 = scmp.eq.s32.totalorder %s24, 0
      %p142 = por %p140, %p141
      %p143 = scmp.ne.s32.totalorder %s129, %s130
      %p144 = scmp.eq.s32.totalorder %s25, 5
      %p145 = por %p143, %p144
      %p147 = scmp.ne.s32.totalorder %s130, %s146
      %p148 = scmp.eq.s32.totalorder %s25, 0
      %p149 = por %p147, %p148
      %s150 = smul.u32 %s26, 6
      %s151 = sadd.s32 %s150, %s27
      %s152 = smul.u32 %s38, 6
      %s153 = sadd.s32 %s152, %s34
      %s154 = ssub.s32 %s151, %s153
      %p155 = scmp.eq.s32.totalorder %s154, 0
      %s157 = sadd.s32 %s156, 1
      %s158 = scalar_select %p155, %s156, %s157
      %p161 = pneg %p155
      %p162 = scmp.eq.s32.totalorder %s19, 5
      %p163 = por %p161, %p162
      %p164 = scmp.ne.s32.totalorder %s156, %s159
      %p165 = scmp.eq.s32.totalorder %s19, 0
      %p166 = por %p164, %p165
      %p167 = scmp.ne.s32.totalorder %s156, %s159
      %p168 = scmp.eq.s32.totalorder %s24, 5
      %p169 = por %p167, %p168
      %p170 = scmp.ne.s32.totalorder %s159, %s160
      %p171 = scmp.eq.s32.totalorder %s24, 0
      %p172 = por %p170, %p171
      %p173 = scmp.ne.s32.totalorder %s159, %s160
      %p174 = scmp.eq.s32.totalorder %s25, 5
      %p175 = por %p173, %p174
      %p177 = scmp.ne.s32.totalorder %s160, %s176
      %p178 = scmp.eq.s32.totalorder %s25, 0
      %p179 = por %p177, %p178
      %s180 = ssub.s32 %s26, %s38
      %p181 = scmp.eq.s32.totalorder %s180, 0
      %s183 = sadd.s32 %s182, 1
      %s184 = scalar_select %p181, %s182, %s183
      %p187 = pneg %p181
      %p188 = scmp.eq.s32.totalorder %s19, 5
      %p189 = por %p187, %p188
      %p190 = scmp.ne.s32.totalorder %s182, %s185
      %p191 = scmp.eq.s32.totalorder %s19, 0
      %p192 = por %p190, %p191
      %p193 = scmp.ne.s32.totalorder %s182, %s185
      %p194 = scmp.eq.s32.totalorder %s24, 5
      %p195 = por %p193, %p194
      %p196 = scmp.ne.s32.totalorder %s185, %s186
      %p197 = scmp.eq.s32.totalorder %s24, 0
      %p198 = por %p196, %p197
      %p199 = scmp.ne.s32.totalorder %s185, %s186
      %p200 = scmp.eq.s32.totalorder %s25, 5
      %p201 = por %p199, %p200
      %p203 = scmp.ne.s32.totalorder %s186, %s202
      %p204 = scmp.eq.s32.totalorder %s25, 0
      %p205 = por %p203, %p204
      %p206 = scmp.le.s32.totalorder 1, %s19
      %p207 = scmp.lt.s32.totalorder %s19, 7
      %p208 = pnand %p206, %p207
      %p209 = pneg %p208
      // Predicated region
      $region9: #{tpu_custom_call.1} parent=5 // pred_check
        _
      $region10: #{tpu_custom_call.1} parent=5 // pred_check_branch
        %211 = sbr.rel (%p208) target = $region12
      $region11: #{tpu_custom_call.1} parent=5 // pred_region
        %s212 = ssub.s32 %s19, 1
        // Predicated region
        $region13: #{tpu_custom_call.1} parent=11 // pred_check
          %p213 = pneg %p52
        $region14: #{tpu_custom_call.1} parent=11 // pred_check_branch
          %215 = sbr.rel (%p213) target = $region16
        $region15: #{tpu_custom_call.1} parent=11 // pred_region
          %217 = vsyncadd [#allocation3], 0
          %s218 = sshll.u32 %s0, 4
          %s219 = int_to_ptr.hbm [resolvable:$true] %s218
          %s220 = sshll.u32 [#allocation2], 4
          %s221 = int_to_ptr.vmem [resolvable:$true] %s220
          %226 = dma.hbm_to_vmem [thread:$0]  %s219, 1536, %s221, [#allocation3], 768, 768, 48
        $region16: #{tpu_custom_call.1} parent=11 // pred_fallthru
          _
      $region12: #{tpu_custom_call.1} parent=5 // pred_fallthru
        _
      %p227 = scmp.lt.s32.totalorder %s19, 6
      // Predicated region
      $region17: #{tpu_custom_call.1} parent=5 // pred_check
        %p228 = pneg %p227
      $region18: #{tpu_custom_call.1} parent=5 // pred_check_branch
        %230 = sbr.rel (%p228) target = $region20
      $region19: #{tpu_custom_call.1} parent=5 // pred_region
        // Predicated region
        $region21: #{tpu_custom_call.1} parent=19 // pred_check
          %p231 = pneg %p76
        $region22: #{tpu_custom_call.1} parent=19 // pred_check_branch
          %233 = sbr.rel (%p231) target = $region24
        $region23: #{tpu_custom_call.1} parent=19 // pred_region
          %s234 = sand.u32 %s19, 1
          %s235 = scalar_lea.sflag [#allocation6], %s234
          %s236 = sand.u32 %s66, 1
          %s237 = smul.addr %s236, 384
          %s238 = scalar_lea.vmem [#allocation5], %s237
          %s239 = smul.u32 %s26, 6
          %s240 = sadd.s32 %s239, %s27
          %s241 = smul.u32 16, %s240
          %243 = vsyncadd %s235, 0
          %s244 = smul.addr %s241, 3
          %s245 = smul.addr %s244, 8
          %s246 = scalar_lea.hbm %s1, %s245
          %s247 = sshll.u32 %s246, 4
          %s248 = int_to_ptr.hbm [resolvable:$true] %s247
          %s249 = sshll.u32 %s238, 4
          %s250 = int_to_ptr.vmem [resolvable:$true] %s249
          %255 = dma.hbm_to_vmem [thread:$0]  %s248, 6144, %s250, %s235, 384, 384, 24
        $region24: #{tpu_custom_call.1} parent=19 // pred_fallthru
          _
        // Predicated region
        $region25: #{tpu_custom_call.1} parent=19 // pred_check
          %p256 = pneg %p106
        $region26: #{tpu_custom_call.1} parent=19 // pred_check_branch
          %258 = sbr.rel (%p256) target = $region28
        $region27: #{tpu_custom_call.1} parent=19 // pred_region
          %s259 = smul.u32 %s26, 6
          %s260 = sadd.s32 %s259, %s27
          %s261 = smul.u32 16, %s260
          %p262 = scmp.lt.s32.totalorder %s261, 95
          %s263 = scalar_select %p262, %s261, 95
          %s264 = smul.addr %s263, 8
          %s265 = scalar_lea.vmem %s2, %s264
          %s266 = smul.u32 %s26, 6
          %s267 = sadd.s32 %s266, %s27
          %s268 = smul.u32 16, %s267
        $region28: #{tpu_custom_call.1} parent=19 // pred_fallthru
          _
        // Predicated region
        $region29: #{tpu_custom_call.1} parent=19 // pred_check
          %p269 = pneg %p136
        $region30: #{tpu_custom_call.1} parent=19 // pred_check_branch
          %271 = sbr.rel (%p269) target = $region32
        $region31: #{tpu_custom_call.1} parent=19 // pred_region
          %s272 = sand.u32 %s19, 1
          %s273 = scalar_lea.sflag [#allocation6], %s272
          %s274 = sand.u32 %s126, 1
          %s275 = scalar_lea.vmem [#allocation7], %s274
          %s276 = smul.u32 %s26, 6
          %s277 = sadd.s32 %s276, %s27
          %279 = vsyncadd %s273, 0
          %s280 = scalar_lea.hbm %s3, %s277
          %s282 = sshll.u32 %s280, 4
          %s283 = int_to_ptr.hbm [resolvable:$true] %s282
          %s284 = sshll.u32 %s275, 4
          %s285 = int_to_ptr.vmem [resolvable:$true] %s284
          %287 = dma.hbm_to_vmem [thread:$0]  %s283, 16, %s285, %s273
        $region32: #{tpu_custom_call.1} parent=19 // pred_fallthru
          _
        // Predicated region
        $region33: #{tpu_custom_call.1} parent=19 // pred_check
          %p288 = pneg %p166
        $region34: #{tpu_custom_call.1} parent=19 // pred_check_branch
          %290 = sbr.rel (%p288) target = $region36
        $region35: #{tpu_custom_call.1} parent=19 // pred_region
          %s291 = sand.u32 %s156, 1
          %s292 = scalar_lea.sflag [#allocation9], %s291
          %s293 = sand.u32 %s156, 1
          %s294 = scalar_lea.vmem [#allocation8], %s293
          %s295 = smul.u32 %s26, 6
          %s296 = sadd.s32 %s295, %s27
          %298 = vsyncadd %s292, 0
          %s299 = scalar_lea.hbm %s4, %s296
          %s301 = sshll.u32 %s299, 4
          %s302 = int_to_ptr.hbm [resolvable:$true] %s301
          %s303 = sshll.u32 %s294, 4
          %s304 = int_to_ptr.vmem [resolvable:$true] %s303
          %306 = dma.hbm_to_vmem [thread:$0]  %s302, 16, %s304, %s292
        $region36: #{tpu_custom_call.1} parent=19 // pred_fallthru
          _
      $region20: #{tpu_custom_call.1} parent=5 // pred_fallthru
        _
      %p307 = scmp.le.s32.totalorder 1, %s19
      %p308 = scmp.lt.s32.totalorder %s19, 7
      %p309 = pnand %p307, %p308
      %p310 = pneg %p309
      // Predicated region
      $region37: #{tpu_custom_call.1} parent=5 // pred_check
        _
      $region38: #{tpu_custom_call.1} parent=5 // pred_check_branch
        %312 = sbr.rel (%p309) target = $region40
      $region39: #{tpu_custom_call.1} parent=5 // pred_region
        %s313 = ssub.s32 %s19, 1
        // Predicated region
        $region41: #{tpu_custom_call.1} parent=39 // pred_check
          %p314 = pneg %p52
        $region42: #{tpu_custom_call.1} parent=39 // pred_check_branch
          %316 = sbr.rel (%p314) target = $region44
        $region43: #{tpu_custom_call.1} parent=39 // pred_region
          %318 = dma.done [#allocation3], 1536
        $region44: #{tpu_custom_call.1} parent=39 // pred_fallthru
          _
        %s319 = sand.u32 %s24, 1
        %s320 = scalar_lea.sflag [#allocation6], %s319
        %s321 = sand.u32 %s69, 1
        %s322 = smul.addr %s321, 384
        %s323 = scalar_lea.vmem [#allocation5], %s322
        // Predicated region
        $region45: #{tpu_custom_call.1} parent=39 // pred_check
          %p324 = pneg %p82
        $region46: #{tpu_custom_call.1} parent=39 // pred_check_branch
          %326 = sbr.rel (%p324) target = $region48
        $region47: #{tpu_custom_call.1} parent=39 // pred_region
          %328 = dma.done %s320, 6144
        $region48: #{tpu_custom_call.1} parent=39 // pred_fallthru
          _
        %s329 = sand.u32 %s24, 1
        %s330 = scalar_lea.sflag [#allocation6], %s329
        %s331 = sand.u32 %s129, 1
        %s332 = scalar_lea.vmem [#allocation7], %s331
        // Predicated region
        $region49: #{tpu_custom_call.1} parent=39 // pred_check
          %p333 = pneg %p142
        $region50: #{tpu_custom_call.1} parent=39 // pred_check_branch
          %335 = sbr.rel (%p333) target = $region52
        $region51: #{tpu_custom_call.1} parent=39 // pred_region
          %337 = dma.done %s330, 16
        $region52: #{tpu_custom_call.1} parent=39 // pred_fallthru
          _
        %s338 = sand.u32 %s159, 1
        %s339 = scalar_lea.sflag [#allocation9], %s338
        %s340 = sand.u32 %s159, 1
        %s341 = scalar_lea.vmem [#allocation8], %s340
        // Predicated region
        $region53: #{tpu_custom_call.1} parent=39 // pred_check
          %p342 = pneg %p172
        $region54: #{tpu_custom_call.1} parent=39 // pred_check_branch
          %344 = sbr.rel (%p342) target = $region56
        $region55: #{tpu_custom_call.1} parent=39 // pred_region
          %346 = dma.done %s339, 16
        $region56: #{tpu_custom_call.1} parent=39 // pred_fallthru
          _
        %p347 = pneg %p52
        %p348 = pneg %p49
        %s349 = sand.u32 %s24, 1
        %s350 = scalar_lea.sflag [#allocation6], %s349
        %s351 = sand.u32 %s69, 1
        %s352 = smul.addr %s351, 384
        %s353 = scalar_lea.vmem [#allocation5], %s352
        %p354 = pneg %p82
        %p355 = pneg %p79
        %s356 = smul.u32 %s28, 6
        %s357 = sadd.s32 %s356, %s29
        %s358 = smul.u32 16, %s357
        %p359 = scmp.lt.s32.totalorder %s358, 95
        %s360 = scalar_select %p359, %s358, 95
        %s361 = smul.addr %s360, 8
        %s362 = scalar_lea.vmem %s2, %s361
        %p363 = pneg %p112
        %p364 = pneg %p109
        %s365 = sand.u32 %s24, 1
        %s366 = scalar_lea.sflag [#allocation6], %s365
        %s367 = sand.u32 %s129, 1
        %s368 = scalar_lea.vmem [#allocation7], %s367
        %p369 = pneg %p142
        %p370 = pneg %p139
        %s371 = sand.u32 %s159, 1
        %s372 = scalar_lea.sflag [#allocation9], %s371
        %s373 = sand.u32 %s159, 1
        %s374 = scalar_lea.vmem [#allocation8], %s373
        %p375 = pneg %p172
        %p376 = pneg %p169
        %p377 = pneg %p198
        %p378 = pneg %p195
        %s379 = smul.u32 %s28, 6
        %s380 = sadd.s32 %s379, %s29
        %s381 = smul.u32 16, %s380
        %s382 = smul.u32 %s28, 6
        %s383 = sadd.s32 %s382, %s29
        %s384 = smul.u32 16, %s383
        %p385 = scmp.lt.s32.totalorder %s384, 95
        %s386 = scalar_select %p385, %s384, 95
        %s387 = smul.addr %s386, 8
        %s388 = scalar_lea.vmem %s2, %s387
        %s389 = smul.u32 %s28, 6
        %s390 = sadd.s32 %s389, %s29
        %s391 = smul.u32 16, %s390
        %s392 = smul.u32 %s28, 6
        %s393 = sadd.s32 %s392, %s29
        %s394 = smul.u32 %s28, 6
        %s395 = sadd.s32 %s394, %s29
        %p396 = scmp.eq.s32.totalorder %s29, 0
        // Predicated region
        $region57: #{tpu_custom_call.1} parent=39 // pred_check
          %p397 = pneg %p396
        $region58: #{tpu_custom_call.1} parent=39 // pred_check_branch
          %399 = sbr.rel (%p397) target = $region60
        $region59: #{tpu_custom_call.1} parent=39 // pred_region
          %400 = vst [vmem:[#allocation10] sm:$0xff] 0.0
          %401 = vst [vmem:[#allocation10 + $0x8] sm:$0xff] 0.0
          %402 = vst [vmem:[#allocation10 + $0x10] sm:$0xff] 0.0
          %403 = vst [vmem:[#allocation10 + $0x18] sm:$0xff] 0.0
          %404 = vst [vmem:[#allocation10 + $0x20] sm:$0xff] 0.0
          %405 = vst [vmem:[#allocation10 + $0x28] sm:$0xff] 0.0
          %406 = vst [vmem:[#allocation10 + $0x30] sm:$0xff] 0.0
          %407 = vst [vmem:[#allocation10 + $0x38] sm:$0xff] 0.0
        $region60: #{tpu_custom_call.1} parent=39 // pred_fallthru
          _
        %v408 = vlaneseq
        %v409 = vshrl.u32 %v408, 7
        %v410 = vadd.s32 %v409, 8
        %v411 = vld [vmem:[%s341] sm:$0x1]
        %v412 = vperm.slane %v411, 0
        %vm413 = vcmp.eq.s32.totalorder %v412, %v409
        %vm414 = vcmp.eq.s32.totalorder %v412, %v410
        %v415 = vsel %vm413, 1, 0
        %v416 = vsel %vm414, 1, 0
        %v417 = vcvt.s32.f32 %v415
        %v418 = vcvt.s32.f32 %v416
        %v419 = vld [vmem:[%s332] sm:$0x1]
        %v420 = vperm.slane %v419, 0
        %vm421 = vcmp.eq.s32.totalorder %v420, %v409
        %vm422 = vcmp.eq.s32.totalorder %v420, %v410
        %v423 = vsel %vm421, 1, 0
        %v424 = vsel %vm422, 1, 0
        %v425 = vcvt.s32.f32 %v423
        %v426 = vcvt.s32.f32 %v424
        %v427 = vld [vmem:[#allocation2] sm:$0xff]
        %v428 = vld [vmem:[#allocation2 + $0x8] sm:$0xff]
        %v429 = vld [vmem:[#allocation2 + $0x10] sm:$0xff]
        %v430 = vld [vmem:[#allocation2 + $0x18] sm:$0xff]
        %v431 = vld [vmem:[#allocation2 + $0x20] sm:$0xff]
        %v432 = vld [vmem:[#allocation2 + $0x28] sm:$0xff]
        %v433 = vld [vmem:[#allocation2 + $0x30] sm:$0xff]
        %v434 = vld [vmem:[#allocation2 + $0x38] sm:$0xff]
        %v435 = vld [vmem:[#allocation2 + $0x40] sm:$0xff]
        %v436 = vld [vmem:[#allocation2 + $0x48] sm:$0xff]
        %v437 = vld [vmem:[#allocation2 + $0x50] sm:$0xff]
        %v438 = vld [vmem:[#allocation2 + $0x58] sm:$0xff]
        %439 = vxpose.xlu0.b32.start [1/16] %v417, 128
        %440 = vxpose.xlu0.b32.cont [2/16] %v418, 128
        %441 = vxpose.xlu0.b32.cont [3/16] 0.0, 128
        %442 = vxpose.xlu0.b32.cont [4/16] 0.0, 128
        %443 = vxpose.xlu0.b32.cont [5/16] 0.0, 128
        %444 = vxpose.xlu0.b32.cont [6/16] 0.0, 128
        %445 = vxpose.xlu0.b32.cont [7/16] 0.0, 128
        %446 = vxpose.xlu0.b32.cont [8/16] 0.0, 128
        %447 = vxpose.xlu0.b32.cont [9/16] 0.0, 128
        %448 = vxpose.xlu0.b32.cont [10/16] 0.0, 128
        %449 = vxpose.xlu0.b32.cont [11/16] 0.0, 128
        %450 = vxpose.xlu0.b32.cont [12/16] 0.0, 128
        %451 = vxpose.xlu0.b32.cont [13/16] 0.0, 128
        %452 = vxpose.xlu0.b32.cont [14/16] 0.0, 128
        %453 = vxpose.xlu0.b32.cont [15/16] 0.0, 128
        %454 = vxpose.xlu0.b32.end [16/16] 0.0, 128
        %v455 = vpop.trf.xlu0
        %v456 = vpop.trf.xlu0
        %v457 = vpop.trf.xlu0
        %v458 = vpop.trf.xlu0
        %v459 = vpop.trf.xlu0
        %v460 = vpop.trf.xlu0
        %v461 = vpop.trf.xlu0
        %v462 = vpop.trf.xlu0
        %v463 = vpop.trf.xlu0
        %v464 = vpop.trf.xlu0
        %v465 = vpop.trf.xlu0
        %v466 = vpop.trf.xlu0
        %v467 = vpop.trf.xlu0
        %v468 = vpop.trf.xlu0
        %v469 = vpop.trf.xlu0
        %v470 = vpop.trf.xlu0
        %vm471 = vcmask 130048
        %v473 = vsel %vm471, %v455, 0
        %v476 = vsel %vm471, %v456, 0
        %v479 = vsel %vm471, %v457, 0
        %v482 = vsel %vm471, %v458, 0
        %v485 = vsel %vm471, %v459, 0
        %v488 = vsel %vm471, %v460, 0
        %v491 = vsel %vm471, %v461, 0
        %v494 = vsel %vm471, %v462, 0
        %v497 = vsel %vm471, %v463, 0
        %v500 = vsel %vm471, %v464, 0
        %v503 = vsel %vm471, %v465, 0
        %v506 = vsel %vm471, %v466, 0
        %v509 = vsel %vm471, %v467, 0
        %v512 = vsel %vm471, %v468, 0
        %v515 = vsel %vm471, %v469, 0
        %v518 = vsel %vm471, %v470, 0
        %520 = vmatpush.msra.mxu0 0.0
        %521 = vmatpush.msra.mxu0 0.0
        %522 = vmatpush.msra.mxu0 0.0
        %523 = vmatpush.msra.mxu0 0.0
        %524 = vmatpush.msra.mxu0 0.0
        %525 = vmatpush.msra.mxu0 0.0
        %526 = vmatpush.msra.mxu0 0.0
        %527 = vmatpush.msra.mxu0 0.0
        %528 = vmatpush.msra.mxu0 0.0
        %529 = vmatpush.msra.mxu0 0.0
        %530 = vmatpush.msra.mxu0 0.0
        %531 = vmatpush.msra.mxu0 0.0
        %532 = vmatpush.msra.mxu0 0.0
        %533 = vmatpush.msra.mxu0 0.0
        %534 = vmatpush.msra.mxu0 %v433
        %535 = vmatpush.msra.mxu0 %v427
        %536 = vmatmul.f32.gmra.mxu0 %v473
        %v537 = vpop.f32.mrf.mxu0
        %v538 = vadd.f32 0.0, %v537
        %539 = vmatmul.f32.gmra.mxu0 %v476
        %v540 = vpop.f32.mrf.mxu0
        %v541 = vadd.f32 0.0, %v540
        %542 = vmatmul.f32.gmra.mxu0 %v479
        %v543 = vpop.f32.mrf.mxu0
        %v544 = vadd.f32 0.0, %v543
        %545 = vmatmul.f32.gmra.mxu0 %v482
        %v546 = vpop.f32.mrf.mxu0
        %v547 = vadd.f32 0.0, %v546
        %548 = vmatmul.f32.gmra.mxu0 %v485
        %v549 = vpop.f32.mrf.mxu0
        %v550 = vadd.f32 0.0, %v549
        %551 = vmatmul.f32.gmra.mxu0 %v488
        %v552 = vpop.f32.mrf.mxu0
        %v553 = vadd.f32 0.0, %v552
        %554 = vmatmul.f32.gmra.mxu0 %v491
        %v555 = vpop.f32.mrf.mxu0
        %v556 = vadd.f32 0.0, %v555
        %557 = vmatmul.f32.gmra.mxu0 %v494
        %v558 = vpop.f32.mrf.mxu0
        %v559 = vadd.f32 0.0, %v558
        %560 = vmatmul.f32.gmra.mxu0 %v497
        %v561 = vpop.f32.mrf.mxu0
        %v562 = vadd.f32 0.0, %v561
        %563 = vmatmul.f32.gmra.mxu0 %v500
        %v564 = vpop.f32.mrf.mxu0
        %v565 = vadd.f32 0.0, %v564
        %566 = vmatmul.f32.gmra.mxu0 %v503
        %v567 = vpop.f32.mrf.mxu0
        %v568 = vadd.f32 0.0, %v567
        %569 = vmatmul.f32.gmra.mxu0 %v506
        %v570 = vpop.f32.mrf.mxu0
        %v571 = vadd.f32 0.0, %v570
        %572 = vmatmul.f32.gmra.mxu0 %v509
        %v573 = vpop.f32.mrf.mxu0
        %v574 = vadd.f32 0.0, %v573
        %575 = vmatmul.f32.gmra.mxu0 %v512
        %v576 = vpop.f32.mrf.mxu0
        %v577 = vadd.f32 0.0, %v576
        %578 = vmatmul.f32.gmra.mxu0 %v515
        %v579 = vpop.f32.mrf.mxu0
        %v580 = vadd.f32 0.0, %v579
        %581 = vmatmul.f32.gmra.mxu0 %v518
        %v582 = vpop.f32.mrf.mxu0
        %v583 = vadd.f32 0.0, %v582
        %584 = vdwg.mxu0
        %585 = vmatpush.msra.mxu0 0.0
        %586 = vmatpush.msra.mxu0 0.0
        %587 = vmatpush.msra.mxu0 0.0
        %588 = vmatpush.msra.mxu0 0.0
        %589 = vmatpush.msra.mxu0 0.0
        %590 = vmatpush.msra.mxu0 0.0
        %591 = vmatpush.msra.mxu0 0.0
        %592 = vmatpush.msra.mxu0 0.0
        %593 = vmatpush.msra.mxu0 0.0
        %594 = vmatpush.msra.mxu0 0.0
        %595 = vmatpush.msra.mxu0 0.0
        %596 = vmatpush.msra.mxu0 0.0
        %597 = vmatpush.msra.mxu0 0.0
        %598 = vmatpush.msra.mxu0 0.0
        %599 = vmatpush.msra.mxu0 %v434
        %600 = vmatpush.msra.mxu0 %v428
        %601 = vmatmul.f32.gmra.mxu0 %v473
        %v602 = vpop.f32.mrf.mxu0
        %v603 = vadd.f32 0.0, %v602
        %604 = vmatmul.f32.gmra.mxu0 %v476
        %v605 = vpop.f32.mrf.mxu0
        %v606 = vadd.f32 0.0, %v605
        %607 = vmatmul.f32.gmra.mxu0 %v479
        %v608 = vpop.f32.mrf.mxu0
        %v609 = vadd.f32 0.0, %v608
        %610 = vmatmul.f32.gmra.mxu0 %v482
        %v611 = vpop.f32.mrf.mxu0
        %v612 = vadd.f32 0.0, %v611
        %613 = vmatmul.f32.gmra.mxu0 %v485
        %v614 = vpop.f32.mrf.mxu0
        %v615 = vadd.f32 0.0, %v614
        %616 = vmatmul.f32.gmra.mxu0 %v488
        %v617 = vpop.f32.mrf.mxu0
        %v618 = vadd.f32 0.0, %v617
        %619 = vmatmul.f32.gmra.mxu0 %v491
        %v620 = vpop.f32.mrf.mxu0
        %v621 = vadd.f32 0.0, %v620
        %622 = vmatmul.f32.gmra.mxu0 %v494
        %v623 = vpop.f32.mrf.mxu0
        %v624 = vadd.f32 0.0, %v623
        %625 = vmatmul.f32.gmra.mxu0 %v497
        %v626 = vpop.f32.mrf.mxu0
        %v627 = vadd.f32 0.0, %v626
        %628 = vmatmul.f32.gmra.mxu0 %v500
        %v629 = vpop.f32.mrf.mxu0
        %v630 = vadd.f32 0.0, %v629
        %631 = vmatmul.f32.gmra.mxu0 %v503
        %v632 = vpop.f32.mrf.mxu0
        %v633 = vadd.f32 0.0, %v632
        %634 = vmatmul.f32.gmra.mxu0 %v506
        %v635 = vpop.f32.mrf.mxu0
        %v636 = vadd.f32 0.0, %v635
        %637 = vmatmul.f32.gmra.mxu0 %v509
        %v638 = vpop.f32.mrf.mxu0
        %v639 = vadd.f32 0.0, %v638
        %640 = vmatmul.f32.gmra.mxu0 %v512
        %v641 = vpop.f32.mrf.mxu0
        %v642 = vadd.f32 0.0, %v641
        %643 = vmatmul.f32.gmra.mxu0 %v515
        %v644 = vpop.f32.mrf.mxu0
        %v645 = vadd.f32 0.0, %v644
        %646 = vmatmul.f32.gmra.mxu0 %v518
        %v647 = vpop.f32.mrf.mxu0
        %v648 = vadd.f32 0.0, %v647
        %649 = vdwg.mxu0
        %650 = vmatpush.msra.mxu0 0.0
        %651 = vmatpush.msra.mxu0 0.0
        %652 = vmatpush.msra.mxu0 0.0
        %653 = vmatpush.msra.mxu0 0.0
        %654 = vmatpush.msra.mxu0 0.0
        %655 = vmatpush.msra.mxu0 0.0
        %656 = vmatpush.msra.mxu0 0.0
        %657 = vmatpush.msra.mxu0 0.0
        %658 = vmatpush.msra.mxu0 0.0
        %659 = vmatpush.msra.mxu0 0.0
        %660 = vmatpush.msra.mxu0 0.0
        %661 = vmatpush.msra.mxu0 0.0
        %662 = vmatpush.msra.mxu0 0.0
        %663 = vmatpush.msra.mxu0 0.0
        %664 = vmatpush.msra.mxu0 %v435
        %665 = vmatpush.msra.mxu0 %v429
        %666 = vmatmul.f32.gmra.mxu0 %v473
        %v667 = vpop.f32.mrf.mxu0
        %v668 = vadd.f32 0.0, %v667
        %669 = vmatmul.f32.gmra.mxu0 %v476
        %v670 = vpop.f32.mrf.mxu0
        %v671 = vadd.f32 0.0, %v670
        %672 = vmatmul.f32.gmra.mxu0 %v479
        %v673 = vpop.f32.mrf.mxu0
        %v674 = vadd.f32 0.0, %v673
        %675 = vmatmul.f32.gmra.mxu0 %v482
        %v676 = vpop.f32.mrf.mxu0
        %v677 = vadd.f32 0.0, %v676
        %678 = vmatmul.f32.gmra.mxu0 %v485
        %v679 = vpop.f32.mrf.mxu0
        %v680 = vadd.f32 0.0, %v679
        %681 = vmatmul.f32.gmra.mxu0 %v488
        %v682 = vpop.f32.mrf.mxu0
        %v683 = vadd.f32 0.0, %v682
        %684 = vmatmul.f32.gmra.mxu0 %v491
        %v685 = vpop.f32.mrf.mxu0
        %v686 = vadd.f32 0.0, %v685
        %687 = vmatmul.f32.gmra.mxu0 %v494
        %v688 = vpop.f32.mrf.mxu0
        %v689 = vadd.f32 0.0, %v688
        %690 = vmatmul.f32.gmra.mxu0 %v497
        %v691 = vpop.f32.mrf.mxu0
        %v692 = vadd.f32 0.0, %v691
        %693 = vmatmul.f32.gmra.mxu0 %v500
        %v694 = vpop.f32.mrf.mxu0
        %v695 = vadd.f32 0.0, %v694
        %696 = vmatmul.f32.gmra.mxu0 %v503
        %v697 = vpop.f32.mrf.mxu0
        %v698 = vadd.f32 0.0, %v697
        %699 = vmatmul.f32.gmra.mxu0 %v506
        %v700 = vpop.f32.mrf.mxu0
        %v701 = vadd.f32 0.0, %v700
        %702 = vmatmul.f32.gmra.mxu0 %v509
        %v703 = vpop.f32.mrf.mxu0
        %v704 = vadd.f32 0.0, %v703
        %705 = vmatmul.f32.gmra.mxu0 %v512
        %v706 = vpop.f32.mrf.mxu0
        %v707 = vadd.f32 0.0, %v706
        %708 = vmatmul.f32.gmra.mxu0 %v515
        %v709 = vpop.f32.mrf.mxu0
        %v710 = vadd.f32 0.0, %v709
        %711 = vmatmul.f32.gmra.mxu0 %v518
        %v712 = vpop.f32.mrf.mxu0
        %v713 = vadd.f32 0.0, %v712
        %714 = vdwg.mxu0
        %715 = vmatpush.msra.mxu0 0.0
        %716 = vmatpush.msra.mxu0 0.0
        %717 = vmatpush.msra.mxu0 0.0
        %718 = vmatpush.msra.mxu0 0.0
        %719 = vmatpush.msra.mxu0 0.0
        %720 = vmatpush.msra.mxu0 0.0
        %721 = vmatpush.msra.mxu0 0.0
        %722 = vmatpush.msra.mxu0 0.0
        %723 = vmatpush.msra.mxu0 0.0
        %724 = vmatpush.msra.mxu0 0.0
        %725 = vmatpush.msra.mxu0 0.0
        %726 = vmatpush.msra.mxu0 0.0
        %727 = vmatpush.msra.mxu0 0.0
        %728 = vmatpush.msra.mxu0 0.0
        %729 = vmatpush.msra.mxu0 %v436
        %730 = vmatpush.msra.mxu0 %v430
        %731 = vmatmul.f32.gmra.mxu0 %v473
        %v732 = vpop.f32.mrf.mxu0
        %v733 = vadd.f32 0.0, %v732
        %734 = vmatmul.f32.gmra.mxu0 %v476
        %v735 = vpop.f32.mrf.mxu0
        %v736 = vadd.f32 0.0, %v735
        %737 = vmatmul.f32.gmra.mxu0 %v479
        %v738 = vpop.f32.mrf.mxu0
        %v739 = vadd.f32 0.0, %v738
        %740 = vmatmul.f32.gmra.mxu0 %v482
        %v741 = vpop.f32.mrf.mxu0
        %v742 = vadd.f32 0.0, %v741
        %743 = vmatmul.f32.gmra.mxu0 %v485
        %v744 = vpop.f32.mrf.mxu0
        %v745 = vadd.f32 0.0, %v744
        %746 = vmatmul.f32.gmra.mxu0 %v488
        %v747 = vpop.f32.mrf.mxu0
        %v748 = vadd.f32 0.0, %v747
        %749 = vmatmul.f32.gmra.mxu0 %v491
        %v750 = vpop.f32.mrf.mxu0
        %v751 = vadd.f32 0.0, %v750
        %752 = vmatmul.f32.gmra.mxu0 %v494
        %v753 = vpop.f32.mrf.mxu0
        %v754 = vadd.f32 0.0, %v753
        %755 = vmatmul.f32.gmra.mxu0 %v497
        %v756 = vpop.f32.mrf.mxu0
        %v757 = vadd.f32 0.0, %v756
        %758 = vmatmul.f32.gmra.mxu0 %v500
        %v759 = vpop.f32.mrf.mxu0
        %v760 = vadd.f32 0.0, %v759
        %761 = vmatmul.f32.gmra.mxu0 %v503
        %v762 = vpop.f32.mrf.mxu0
        %v763 = vadd.f32 0.0, %v762
        %764 = vmatmul.f32.gmra.mxu0 %v506
        %v765 = vpop.f32.mrf.mxu0
        %v766 = vadd.f32 0.0, %v765
        %767 = vmatmul.f32.gmra.mxu0 %v509
        %v768 = vpop.f32.mrf.mxu0
        %v769 = vadd.f32 0.0, %v768
        %770 = vmatmul.f32.gmra.mxu0 %v512
        %v771 = vpop.f32.mrf.mxu0
        %v772 = vadd.f32 0.0, %v771
        %773 = vmatmul.f32.gmra.mxu0 %v515
        %v774 = vpop.f32.mrf.mxu0
        %v775 = vadd.f32 0.0, %v774
        %776 = vmatmul.f32.gmra.mxu0 %v518
        %v777 = vpop.f32.mrf.mxu0
        %v778 = vadd.f32 0.0, %v777
        %779 = vdwg.mxu0
        %780 = vmatpush.msra.mxu0 0.0
        %781 = vmatpush.msra.mxu0 0.0
        %782 = vmatpush.msra.mxu0 0.0
        %783 = vmatpush.msra.mxu0 0.0
        %784 = vmatpush.msra.mxu0 0.0
        %785 = vmatpush.msra.mxu0 0.0
        %786 = vmatpush.msra.mxu0 0.0
        %787 = vmatpush.msra.mxu0 0.0
        %788 = vmatpush.msra.mxu0 0.0
        %789 = vmatpush.msra.mxu0 0.0
        %790 = vmatpush.msra.mxu0 0.0
        %791 = vmatpush.msra.mxu0 0.0
        %792 = vmatpush.msra.mxu0 0.0
        %793 = vmatpush.msra.mxu0 0.0
        %794 = vmatpush.msra.mxu0 %v437
        %795 = vmatpush.msra.mxu0 %v431
        %796 = vmatmul.f32.gmra.mxu0 %v473
        %v797 = vpop.f32.mrf.mxu0
        %v798 = vadd.f32 0.0, %v797
        %799 = vmatmul.f32.gmra.mxu0 %v476
        %v800 = vpop.f32.mrf.mxu0
        %v801 = vadd.f32 0.0, %v800
        %802 = vmatmul.f32.gmra.mxu0 %v479
        %v803 = vpop.f32.mrf.mxu0
        %v804 = vadd.f32 0.0, %v803
        %805 = vmatmul.f32.gmra.mxu0 %v482
        %v806 = vpop.f32.mrf.mxu0
        %v807 = vadd.f32 0.0, %v806
        %808 = vmatmul.f32.gmra.mxu0 %v485
        %v809 = vpop.f32.mrf.mxu0
        %v810 = vadd.f32 0.0, %v809
        %811 = vmatmul.f32.gmra.mxu0 %v488
        %v812 = vpop.f32.mrf.mxu0
        %v813 = vadd.f32 0.0, %v812
        %814 = vmatmul.f32.gmra.mxu0 %v491
        %v815 = vpop.f32.mrf.mxu0
        %v816 = vadd.f32 0.0, %v815
        %817 = vmatmul.f32.gmra.mxu0 %v494
        %v818 = vpop.f32.mrf.mxu0
        %v819 = vadd.f32 0.0, %v818
        %820 = vmatmul.f32.gmra.mxu0 %v497
        %v821 = vpop.f32.mrf.mxu0
        %v822 = vadd.f32 0.0, %v821
        %823 = vmatmul.f32.gmra.mxu0 %v500
        %v824 = vpop.f32.mrf.mxu0
        %v825 = vadd.f32 0.0, %v824
        %826 = vmatmul.f32.gmra.mxu0 %v503
        %v827 = vpop.f32.mrf.mxu0
        %v828 = vadd.f32 0.0, %v827
        %829 = vmatmul.f32.gmra.mxu0 %v506
        %v830 = vpop.f32.mrf.mxu0
        %v831 = vadd.f32 0.0, %v830
        %832 = vmatmul.f32.gmra.mxu0 %v509
        %v833 = vpop.f32.mrf.mxu0
        %v834 = vadd.f32 0.0, %v833
        %835 = vmatmul.f32.gmra.mxu0 %v512
        %v836 = vpop.f32.mrf.mxu0
        %v837 = vadd.f32 0.0, %v836
        %838 = vmatmul.f32.gmra.mxu0 %v515
        %v839 = vpop.f32.mrf.mxu0
        %v840 = vadd.f32 0.0, %v839
        %841 = vmatmul.f32.gmra.mxu0 %v518
        %v842 = vpop.f32.mrf.mxu0
        %v843 = vadd.f32 0.0, %v842
        %844 = vdwg.mxu0
        %845 = vmatpush.msra.mxu0 0.0
        %846 = vmatpush.msra.mxu0 0.0
        %847 = vmatpush.msra.mxu0 0.0
        %848 = vmatpush.msra.mxu0 0.0
        %849 = vmatpush.msra.mxu0 0.0
        %850 = vmatpush.msra.mxu0 0.0
        %851 = vmatpush.msra.mxu0 0.0
        %852 = vmatpush.msra.mxu0 0.0
        %853 = vmatpush.msra.mxu0 0.0
        %854 = vmatpush.msra.mxu0 0.0
        %855 = vmatpush.msra.mxu0 0.0
        %856 = vmatpush.msra.mxu0 0.0
        %857 = vmatpush.msra.mxu0 0.0
        %858 = vmatpush.msra.mxu0 0.0
        %859 = vmatpush.msra.mxu0 %v438
        %860 = vmatpush.msra.mxu0 %v432
        %861 = vmatmul.f32.gmra.mxu0 %v473
        %v862 = vpop.f32.mrf.mxu0
        %v863 = vadd.f32 0.0, %v862
        %864 = vmatmul.f32.gmra.mxu0 %v476
        %v865 = vpop.f32.mrf.mxu0
        %v866 = vadd.f32 0.0, %v865
        %867 = vmatmul.f32.gmra.mxu0 %v479
        %v868 = vpop.f32.mrf.mxu0
        %v869 = vadd.f32 0.0, %v868
        %870 = vmatmul.f32.gmra.mxu0 %v482
        %v871 = vpop.f32.mrf.mxu0
        %v872 = vadd.f32 0.0, %v871
        %873 = vmatmul.f32.gmra.mxu0 %v485
        %v874 = vpop.f32.mrf.mxu0
        %v875 = vadd.f32 0.0, %v874
        %876 = vmatmul.f32.gmra.mxu0 %v488
        %v877 = vpop.f32.mrf.mxu0
        %v878 = vadd.f32 0.0, %v877
        %879 = vmatmul.f32.gmra.mxu0 %v491
        %v880 = vpop.f32.mrf.mxu0
        %v881 = vadd.f32 0.0, %v880
        %882 = vmatmul.f32.gmra.mxu0 %v494
        %v883 = vpop.f32.mrf.mxu0
        %v884 = vadd.f32 0.0, %v883
        %885 = vmatmul.f32.gmra.mxu0 %v497
        %v886 = vpop.f32.mrf.mxu0
        %v887 = vadd.f32 0.0, %v886
        %888 = vmatmul.f32.gmra.mxu0 %v500
        %v889 = vpop.f32.mrf.mxu0
        %v890 = vadd.f32 0.0, %v889
        %891 = vmatmul.f32.gmra.mxu0 %v503
        %v892 = vpop.f32.mrf.mxu0
        %v893 = vadd.f32 0.0, %v892
        %894 = vmatmul.f32.gmra.mxu0 %v506
        %v895 = vpop.f32.mrf.mxu0
        %v896 = vadd.f32 0.0, %v895
        %897 = vmatmul.f32.gmra.mxu0 %v509
        %v898 = vpop.f32.mrf.mxu0
        %v899 = vadd.f32 0.0, %v898
        %900 = vmatmul.f32.gmra.mxu0 %v512
        %v901 = vpop.f32.mrf.mxu0
        %v902 = vadd.f32 0.0, %v901
        %903 = vmatmul.f32.gmra.mxu0 %v515
        %v904 = vpop.f32.mrf.mxu0
        %v905 = vadd.f32 0.0, %v904
        %906 = vmatmul.f32.gmra.mxu0 %v518
        %v907 = vpop.f32.mrf.mxu0
        %v908 = vadd.f32 0.0, %v907
        %909 = vdwg.mxu0
        %v910 = vld [vmem:[%s323] sm:$0xff]
        %v911 = vld [vmem:[%s323 + $0x8] sm:$0xff]
        %v912 = vld [vmem:[%s323 + $0x10] sm:$0xff]
        %v913 = vld [vmem:[%s323 + $0x18] sm:$0xff]
        %v914 = vld [vmem:[%s323 + $0x20] sm:$0xff]
        %v915 = vld [vmem:[%s323 + $0x28] sm:$0xff]
        %v916 = vld [vmem:[%s323 + $0x30] sm:$0xff]
        %v917 = vld [vmem:[%s323 + $0x38] sm:$0xff]
        %v918 = vld [vmem:[%s323 + $0x40] sm:$0xff]
        %v919 = vld [vmem:[%s323 + $0x48] sm:$0xff]
        %v920 = vld [vmem:[%s323 + $0x50] sm:$0xff]
        %v921 = vld [vmem:[%s323 + $0x58] sm:$0xff]
        %v922 = vld [vmem:[%s323 + $0x60] sm:$0xff]
        %v923 = vld [vmem:[%s323 + $0x68] sm:$0xff]
        %v924 = vld [vmem:[%s323 + $0x70] sm:$0xff]
        %v925 = vld [vmem:[%s323 + $0x78] sm:$0xff]
        %v926 = vld [vmem:[%s323 + $0x80] sm:$0xff]
        %v927 = vld [vmem:[%s323 + $0x88] sm:$0xff]
        %v928 = vld [vmem:[%s323 + $0x90] sm:$0xff]
        %v929 = vld [vmem:[%s323 + $0x98] sm:$0xff]
        %v930 = vld [vmem:[%s323 + $0xa0] sm:$0xff]
        %v931 = vld [vmem:[%s323 + $0xa8] sm:$0xff]
        %v932 = vld [vmem:[%s323 + $0xb0] sm:$0xff]
        %v933 = vld [vmem:[%s323 + $0xb8] sm:$0xff]
        %v934 = vld [vmem:[%s323 + $0xc0] sm:$0xff]
        %v935 = vld [vmem:[%s323 + $0xc8] sm:$0xff]
        %v936 = vld [vmem:[%s323 + $0xd0] sm:$0xff]
        %v937 = vld [vmem:[%s323 + $0xd8] sm:$0xff]
        %v938 = vld [vmem:[%s323 + $0xe0] sm:$0xff]
        %v939 = vld [vmem:[%s323 + $0xe8] sm:$0xff]
        %v940 = vld [vmem:[%s323 + $0xf0] sm:$0xff]
        %v941 = vld [vmem:[%s323 + $0xf8] sm:$0xff]
        %v942 = vld [vmem:[%s323 + $0x100] sm:$0xff]
        %v943 = vld [vmem:[%s323 + $0x108] sm:$0xff]
        %v944 = vld [vmem:[%s323 + $0x110] sm:$0xff]
        %v945 = vld [vmem:[%s323 + $0x118] sm:$0xff]
        %v946 = vld [vmem:[%s323 + $0x120] sm:$0xff]
        %v947 = vld [vmem:[%s323 + $0x128] sm:$0xff]
        %v948 = vld [vmem:[%s323 + $0x130] sm:$0xff]
        %v949 = vld [vmem:[%s323 + $0x138] sm:$0xff]
        %v950 = vld [vmem:[%s323 + $0x140] sm:$0xff]
        %v951 = vld [vmem:[%s323 + $0x148] sm:$0xff]
        %v952 = vld [vmem:[%s323 + $0x150] sm:$0xff]
        %v953 = vld [vmem:[%s323 + $0x158] sm:$0xff]
        %v954 = vld [vmem:[%s323 + $0x160] sm:$0xff]
        %v955 = vld [vmem:[%s323 + $0x168] sm:$0xff]
        %v956 = vld [vmem:[%s323 + $0x170] sm:$0xff]
        %v957 = vld [vmem:[%s323 + $0x178] sm:$0xff]
        %v958 = vmul.f32 %v910, %v538
        %v959 = vmul.f32 %v911, %v603
        %v960 = vmul.f32 %v912, %v668
        %v961 = vmul.f32 %v913, %v541
        %v962 = vmul.f32 %v914, %v606
        %v963 = vmul.f32 %v915, %v671
        %v964 = vmul.f32 %v916, %v544
        %v965 = vmul.f32 %v917, %v609
        %v966 = vmul.f32 %v918, %v674
        %v967 = vmul.f32 %v919, %v547
        %v968 = vmul.f32 %v920, %v612
        %v969 = vmul.f32 %v921, %v677
        %v970 = vmul.f32 %v922, %v550
        %v971 = vmul.f32 %v923, %v615
        %v972 = vmul.f32 %v924, %v680
        %v973 = vmul.f32 %v925, %v553
        %v974 = vmul.f32 %v926, %v618
        %v975 = vmul.f32 %v927, %v683
        %v976 = vmul.f32 %v928, %v556
        %v977 = vmul.f32 %v929, %v621
        %v978 = vmul.f32 %v930, %v686
        %v979 = vmul.f32 %v931, %v559
        %v980 = vmul.f32 %v932, %v624
        %v981 = vmul.f32 %v933, %v689
        %v982 = vmul.f32 %v934, %v562
        %v983 = vmul.f32 %v935, %v627
        %v984 = vmul.f32 %v936, %v692
        %v985 = vmul.f32 %v937, %v565
        %v986 = vmul.f32 %v938, %v630
        %v987 = vmul.f32 %v939, %v695
        %v988 = vmul.f32 %v940, %v568
        %v989 = vmul.f32 %v941, %v633
        %v990 = vmul.f32 %v942, %v698
        %v991 = vmul.f32 %v943, %v571
        %v992 = vmul.f32 %v944, %v636
        %v993 = vmul.f32 %v945, %v701
        %v994 = vmul.f32 %v946, %v574
        %v995 = vmul.f32 %v947, %v639
        %v996 = vmul.f32 %v948, %v704
        %v997 = vmul.f32 %v949, %v577
        %v998 = vmul.f32 %v950, %v642
        %v999 = vmul.f32 %v951, %v707
        %v1000 = vmul.f32 %v952, %v580
        %v1001 = vmul.f32 %v953, %v645
        %v1002 = vmul.f32 %v954, %v710
        %v1003 = vmul.f32 %v955, %v583
        %v1004 = vmul.f32 %v956, %v648
        %v1005 = vmul.f32 %v957, %v713
        %v1006 = vld [vmem:[%s388] sm:$0xff]
        %v1007 = vld [vmem:[%s388 + $0x8] sm:$0xff]
        %v1008 = vld [vmem:[%s388 + $0x10] sm:$0xff]
        %v1009 = vld [vmem:[%s388 + $0x18] sm:$0xff]
        %v1010 = vld [vmem:[%s388 + $0x20] sm:$0xff]
        %v1011 = vld [vmem:[%s388 + $0x28] sm:$0xff]
        %v1012 = vld [vmem:[%s388 + $0x30] sm:$0xff]
        %v1013 = vld [vmem:[%s388 + $0x38] sm:$0xff]
        %v1014 = vld [vmem:[%s388 + $0x40] sm:$0xff]
        %v1015 = vld [vmem:[%s388 + $0x48] sm:$0xff]
        %v1016 = vld [vmem:[%s388 + $0x50] sm:$0xff]
        %v1017 = vld [vmem:[%s388 + $0x58] sm:$0xff]
        %v1018 = vld [vmem:[%s388 + $0x60] sm:$0xff]
        %v1019 = vld [vmem:[%s388 + $0x68] sm:$0xff]
        %v1020 = vld [vmem:[%s388 + $0x70] sm:$0xff]
        %v1021 = vld [vmem:[%s388 + $0x78] sm:$0xff]
        %1023 = vset.pattern.permute.xlu0 0
        %1024 = vperm.xlu0 %1023, %v1006
        %v1025 = vpop.permute.xlu0 %1024
        %1028 = vset.pattern.permute.xlu0 0
        %1029 = vperm.xlu0 %1028, %v1007
        %v1030 = vpop.permute.xlu0 %1029
        %1033 = vset.pattern.permute.xlu0 0
        %1034 = vperm.xlu0 %1033, %v1008
        %v1035 = vpop.permute.xlu0 %1034
        %1038 = vset.pattern.permute.xlu0 0
        %1039 = vperm.xlu0 %1038, %v1009
        %v1040 = vpop.permute.xlu0 %1039
        %1043 = vset.pattern.permute.xlu0 0
        %1044 = vperm.xlu0 %1043, %v1010
        %v1045 = vpop.permute.xlu0 %1044
        %1048 = vset.pattern.permute.xlu0 0
        %1049 = vperm.xlu0 %1048, %v1011
        %v1050 = vpop.permute.xlu0 %1049
        %1053 = vset.pattern.permute.xlu0 0
        %1054 = vperm.xlu0 %1053, %v1012
        %v1055 = vpop.permute.xlu0 %1054
        %1058 = vset.pattern.permute.xlu0 0
        %1059 = vperm.xlu0 %1058, %v1013
        %v1060 = vpop.permute.xlu0 %1059
        %1063 = vset.pattern.permute.xlu0 0
        %1064 = vperm.xlu0 %1063, %v1014
        %v1065 = vpop.permute.xlu0 %1064
        %1068 = vset.pattern.permute.xlu0 0
        %1069 = vperm.xlu0 %1068, %v1015
        %v1070 = vpop.permute.xlu0 %1069
        %1073 = vset.pattern.permute.xlu0 0
        %1074 = vperm.xlu0 %1073, %v1016
        %v1075 = vpop.permute.xlu0 %1074
        %1078 = vset.pattern.permute.xlu0 0
        %1079 = vperm.xlu0 %1078, %v1017
        %v1080 = vpop.permute.xlu0 %1079
        %1083 = vset.pattern.permute.xlu0 0
        %1084 = vperm.xlu0 %1083, %v1018
        %v1085 = vpop.permute.xlu0 %1084
        %1088 = vset.pattern.permute.xlu0 0
        %1089 = vperm.xlu0 %1088, %v1019
        %v1090 = vpop.permute.xlu0 %1089
        %1093 = vset.pattern.permute.xlu0 0
        %1094 = vperm.xlu0 %1093, %v1020
        %v1095 = vpop.permute.xlu0 %1094
        %1098 = vset.pattern.permute.xlu0 0
        %1099 = vperm.xlu0 %1098, %v1021
        %v1100 = vpop.permute.xlu0 %1099
        %v1102 = vmul.f32 %v959, %v1025
        %v1103 = vmul.f32 %v962, %v1030
        %v1104 = vmul.f32 %v965, %v1035
        %v1105 = vmul.f32 %v968, %v1040
        %v1106 = vmul.f32 %v971, %v1045
        %v1107 = vmul.f32 %v974, %v1050
        %v1108 = vmul.f32 %v977, %v1055
        %v1109 = vmul.f32 %v980, %v1060
        %v1110 = vmul.f32 %v983, %v1065
        %v1111 = vmul.f32 %v986, %v1070
        %v1112 = vmul.f32 %v989, %v1075
        %v1113 = vmul.f32 %v992, %v1080
        %v1114 = vmul.f32 %v995, %v1085
        %v1115 = vmul.f32 %v998, %v1090
        %v1116 = vmul.f32 %v1001, %v1095
        %v1117 = vmul.f32 %v1004, %v1100
        %v1118 = vmul.f32 %v960, %v733
        %v1119 = vmul.f32 %v963, %v736
        %v1120 = vmul.f32 %v966, %v739
        %v1121 = vmul.f32 %v969, %v742
        %v1122 = vmul.f32 %v972, %v745
        %v1123 = vmul.f32 %v975, %v748
        %v1124 = vmul.f32 %v978, %v751
        %v1125 = vmul.f32 %v981, %v754
        %v1126 = vmul.f32 %v984, %v757
        %v1127 = vmul.f32 %v987, %v760
        %v1128 = vmul.f32 %v990, %v763
        %v1129 = vmul.f32 %v993, %v766
        %v1130 = vmul.f32 %v996, %v769
        %v1131 = vmul.f32 %v999, %v772
        %v1132 = vmul.f32 %v1002, %v775
        %v1133 = vmul.f32 %v1005, %v778
        %v1134 = vadd.f32 %v1102, %v1118
        %v1135 = vadd.f32 %v1103, %v1119
        %v1136 = vadd.f32 %v1104, %v1120
        %v1137 = vadd.f32 %v1105, %v1121
        %v1138 = vadd.f32 %v1106, %v1122
        %v1139 = vadd.f32 %v1107, %v1123
        %v1140 = vadd.f32 %v1108, %v1124
        %v1141 = vadd.f32 %v1109, %v1125
        %v1142 = vadd.f32 %v1110, %v1126
        %v1143 = vadd.f32 %v1111, %v1127
        %v1144 = vadd.f32 %v1112, %v1128
        %v1145 = vadd.f32 %v1113, %v1129
        %v1146 = vadd.f32 %v1114, %v1130
        %v1147 = vadd.f32 %v1115, %v1131
        %v1148 = vadd.f32 %v1116, %v1132
        %v1149 = vadd.f32 %v1117, %v1133
        %1150 = vset.pattern.permute.xlu0 1
        %1151 = vperm.xlu0 %1150, %v1006
        %v1152 = vpop.permute.xlu0 %1151
        %1154 = vset.pattern.permute.xlu0 1
        %1155 = vperm.xlu0 %1154, %v1007
        %v1156 = vpop.permute.xlu0 %1155
        %1158 = vset.pattern.permute.xlu0 1
        %1159 = vperm.xlu0 %1158, %v1008
        %v1160 = vpop.permute.xlu0 %1159
        %1162 = vset.pattern.permute.xlu0 1
        %1163 = vperm.xlu0 %1162, %v1009
        %v1164 = vpop.permute.xlu0 %1163
        %1166 = vset.pattern.permute.xlu0 1
        %1167 = vperm.xlu0 %1166, %v1010
        %v1168 = vpop.permute.xlu0 %1167
        %1170 = vset.pattern.permute.xlu0 1
        %1171 = vperm.xlu0 %1170, %v1011
        %v1172 = vpop.permute.xlu0 %1171
        %1174 = vset.pattern.permute.xlu0 1
        %1175 = vperm.xlu0 %1174, %v1012
        %v1176 = vpop.permute.xlu0 %1175
        %1178 = vset.pattern.permute.xlu0 1
        %1179 = vperm.xlu0 %1178, %v1013
        %v1180 = vpop.permute.xlu0 %1179
        %1182 = vset.pattern.permute.xlu0 1
        %1183 = vperm.xlu0 %1182, %v1014
        %v1184 = vpop.permute.xlu0 %1183
        %1186 = vset.pattern.permute.xlu0 1
        %1187 = vperm.xlu0 %1186, %v1015
        %v1188 = vpop.permute.xlu0 %1187
        %1190 = vset.pattern.permute.xlu0 1
        %1191 = vperm.xlu0 %1190, %v1016
        %v1192 = vpop.permute.xlu0 %1191
        %1194 = vset.pattern.permute.xlu0 1
        %1195 = vperm.xlu0 %1194, %v1017
        %v1196 = vpop.permute.xlu0 %1195
        %1198 = vset.pattern.permute.xlu0 1
        %1199 = vperm.xlu0 %1198, %v1018
        %v1200 = vpop.permute.xlu0 %1199
        %1202 = vset.pattern.permute.xlu0 1
        %1203 = vperm.xlu0 %1202, %v1019
        %v1204 = vpop.permute.xlu0 %1203
        %1206 = vset.pattern.permute.xlu0 1
        %1207 = vperm.xlu0 %1206, %v1020
        %v1208 = vpop.permute.xlu0 %1207
        %1210 = vset.pattern.permute.xlu0 1
        %1211 = vperm.xlu0 %1210, %v1021
        %v1212 = vpop.permute.xlu0 %1211
        %v1214 = vmul.f32 %v959, %v1152
        %v1215 = vmul.f32 %v962, %v1156
        %v1216 = vmul.f32 %v965, %v1160
        %v1217 = vmul.f32 %v968, %v1164
        %v1218 = vmul.f32 %v971, %v1168
        %v1219 = vmul.f32 %v974, %v1172
        %v1220 = vmul.f32 %v977, %v1176
        %v1221 = vmul.f32 %v980, %v1180
        %v1222 = vmul.f32 %v983, %v1184
        %v1223 = vmul.f32 %v986, %v1188
        %v1224 = vmul.f32 %v989, %v1192
        %v1225 = vmul.f32 %v992, %v1196
        %v1226 = vmul.f32 %v995, %v1200
        %v1227 = vmul.f32 %v998, %v1204
        %v1228 = vmul.f32 %v1001, %v1208
        %v1229 = vmul.f32 %v1004, %v1212
        %v1230 = vmul.f32 %v960, %v798
        %v1231 = vmul.f32 %v963, %v801
        %v1232 = vmul.f32 %v966, %v804
        %v1233 = vmul.f32 %v969, %v807
        %v1234 = vmul.f32 %v972, %v810
        %v1235 = vmul.f32 %v975, %v813
        %v1236 = vmul.f32 %v978, %v816
        %v1237 = vmul.f32 %v981, %v819
        %v1238 = vmul.f32 %v984, %v822
        %v1239 = vmul.f32 %v987, %v825
        %v1240 = vmul.f32 %v990, %v828
        %v1241 = vmul.f32 %v993, %v831
        %v1242 = vmul.f32 %v996, %v834
        %v1243 = vmul.f32 %v999, %v837
        %v1244 = vmul.f32 %v1002, %v840
        %v1245 = vmul.f32 %v1005, %v843
        %v1246 = vadd.f32 %v1214, %v1230
        %v1247 = vadd.f32 %v1215, %v1231
        %v1248 = vadd.f32 %v1216, %v1232
        %v1249 = vadd.f32 %v1217, %v1233
        %v1250 = vadd.f32 %v1218, %v1234
        %v1251 = vadd.f32 %v1219, %v1235
        %v1252 = vadd.f32 %v1220, %v1236
        %v1253 = vadd.f32 %v1221, %v1237
        %v1254 = vadd.f32 %v1222, %v1238
        %v1255 = vadd.f32 %v1223, %v1239
        %v1256 = vadd.f32 %v1224, %v1240
        %v1257 = vadd.f32 %v1225, %v1241
        %v1258 = vadd.f32 %v1226, %v1242
        %v1259 = vadd.f32 %v1227, %v1243
        %v1260 = vadd.f32 %v1228, %v1244
        %v1261 = vadd.f32 %v1229, %v1245
        %1262 = vset.pattern.permute.xlu0 2
        %1263 = vperm.xlu0 %1262, %v1006
        %v1264 = vpop.permute.xlu0 %1263
        %1266 = vset.pattern.permute.xlu0 2
        %1267 = vperm.xlu0 %1266, %v1007
        %v1268 = vpop.permute.xlu0 %1267
        %1270 = vset.pattern.permute.xlu0 2
        %1271 = vperm.xlu0 %1270, %v1008
        %v1272 = vpop.permute.xlu0 %1271
        %1274 = vset.pattern.permute.xlu0 2
        %1275 = vperm.xlu0 %1274, %v1009
        %v1276 = vpop.permute.xlu0 %1275
        %1278 = vset.pattern.permute.xlu0 2
        %1279 = vperm.xlu0 %1278, %v1010
        %v1280 = vpop.permute.xlu0 %1279
        %1282 = vset.pattern.permute.xlu0 2
        %1283 = vperm.xlu0 %1282, %v1011
        %v1284 = vpop.permute.xlu0 %1283
        %1286 = vset.pattern.permute.xlu0 2
        %1287 = vperm.xlu0 %1286, %v1012
        %v1288 = vpop.permute.xlu0 %1287
        %1290 = vset.pattern.permute.xlu0 2
        %1291 = vperm.xlu0 %1290, %v1013
        %v1292 = vpop.permute.xlu0 %1291
        %1294 = vset.pattern.permute.xlu0 2
        %1295 = vperm.xlu0 %1294, %v1014
        %v1296 = vpop.permute.xlu0 %1295
        %1298 = vset.pattern.permute.xlu0 2
        %1299 = vperm.xlu0 %1298, %v1015
        %v1300 = vpop.permute.xlu0 %1299
        %1302 = vset.pattern.permute.xlu0 2
        %1303 = vperm.xlu0 %1302, %v1016
        %v1304 = vpop.permute.xlu0 %1303
        %1306 = vset.pattern.permute.xlu0 2
        %1307 = vperm.xlu0 %1306, %v1017
        %v1308 = vpop.permute.xlu0 %1307
        %1310 = vset.pattern.permute.xlu0 2
        %1311 = vperm.xlu0 %1310, %v1018
        %v1312 = vpop.permute.xlu0 %1311
        %1314 = vset.pattern.permute.xlu0 2
        %1315 = vperm.xlu0 %1314, %v1019
        %v1316 = vpop.permute.xlu0 %1315
        %1318 = vset.pattern.permute.xlu0 2
        %1319 = vperm.xlu0 %1318, %v1020
        %v1320 = vpop.permute.xlu0 %1319
        %1322 = vset.pattern.permute.xlu0 2
        %1323 = vperm.xlu0 %1322, %v1021
        %v1324 = vpop.permute.xlu0 %1323
        %v1326 = vmul.f32 %v959, %v1264
        %v1327 = vmul.f32 %v962, %v1268
        %v1328 = vmul.f32 %v965, %v1272
        %v1329 = vmul.f32 %v968, %v1276
        %v1330 = vmul.f32 %v971, %v1280
        %v1331 = vmul.f32 %v974, %v1284
        %v1332 = vmul.f32 %v977, %v1288
        %v1333 = vmul.f32 %v980, %v1292
        %v1334 = vmul.f32 %v983, %v1296
        %v1335 = vmul.f32 %v986, %v1300
        %v1336 = vmul.f32 %v989, %v1304
        %v1337 = vmul.f32 %v992, %v1308
        %v1338 = vmul.f32 %v995, %v1312
        %v1339 = vmul.f32 %v998, %v1316
        %v1340 = vmul.f32 %v1001, %v1320
        %v1341 = vmul.f32 %v1004, %v1324
        %v1342 = vmul.f32 %v960, %v863
        %v1343 = vmul.f32 %v963, %v866
        %v1344 = vmul.f32 %v966, %v869
        %v1345 = vmul.f32 %v969, %v872
        %v1346 = vmul.f32 %v972, %v875
        %v1347 = vmul.f32 %v975, %v878
        %v1348 = vmul.f32 %v978, %v881
        %v1349 = vmul.f32 %v981, %v884
        %v1350 = vmul.f32 %v984, %v887
        %v1351 = vmul.f32 %v987, %v890
        %v1352 = vmul.f32 %v990, %v893
        %v1353 = vmul.f32 %v993, %v896
        %v1354 = vmul.f32 %v996, %v899
        %v1355 = vmul.f32 %v999, %v902
        %v1356 = vmul.f32 %v1002, %v905
        %v1357 = vmul.f32 %v1005, %v908
        %v1358 = vadd.f32 %v1326, %v1342
        %v1359 = vadd.f32 %v1327, %v1343
        %v1360 = vadd.f32 %v1328, %v1344
        %v1361 = vadd.f32 %v1329, %v1345
        %v1362 = vadd.f32 %v1330, %v1346
        %v1363 = vadd.f32 %v1331, %v1347
        %v1364 = vadd.f32 %v1332, %v1348
        %v1365 = vadd.f32 %v1333, %v1349
        %v1366 = vadd.f32 %v1334, %v1350
        %v1367 = vadd.f32 %v1335, %v1351
        %v1368 = vadd.f32 %v1336, %v1352
        %v1369 = vadd.f32 %v1337, %v1353
        %v1370 = vadd.f32 %v1338, %v1354
        %v1371 = vadd.f32 %v1339, %v1355
        %v1372 = vadd.f32 %v1340, %v1356
        %v1373 = vadd.f32 %v1341, %v1357
        %v1374 = vld [vmem:[#allocation10] sm:$0xff]
        %v1375 = vld [vmem:[#allocation10 + $0x8] sm:$0xff]
        %v1376 = vld [vmem:[#allocation10 + $0x10] sm:$0xff]
        %v1377 = vld [vmem:[#allocation10 + $0x18] sm:$0xff]
        %v1378 = vld [vmem:[#allocation10 + $0x20] sm:$0xff]
        %v1379 = vld [vmem:[#allocation10 + $0x28] sm:$0xff]
        %v1380 = vld [vmem:[#allocation10 + $0x30] sm:$0xff]
        %v1381 = vld [vmem:[#allocation10 + $0x38] sm:$0xff]
        %1382 = vmatpush.msra.mxu0 %v1003
        %1383 = vmatpush.msra.mxu0 %v1000
        %1384 = vmatpush.msra.mxu0 %v997
        %1385 = vmatpush.msra.mxu0 %v994
        %1386 = vmatpush.msra.mxu0 %v991
        %1387 = vmatpush.msra.mxu0 %v988
        %1388 = vmatpush.msra.mxu0 %v985
        %1389 = vmatpush.msra.mxu0 %v982
        %1390 = vmatpush.msra.mxu0 %v979
        %1391 = vmatpush.msra.mxu0 %v976
        %1392 = vmatpush.msra.mxu0 %v973
        %1393 = vmatpush.msra.mxu0 %v970
        %1394 = vmatpush.msra.mxu0 %v967
        %1395 = vmatpush.msra.mxu0 %v964
        %1396 = vmatpush.msra.mxu0 %v961
        %1397 = vmatpush.msra.mxu0 %v958
        %1398 = vmatmul.f32.gmra.mxu0 %v425
        %v1399 = vpop.f32.mrf.mxu0
        %v1400 = vadd.f32 0.0, %v1399
        %1401 = vmatmul.f32.gmra.mxu0 %v426
        %v1402 = vpop.f32.mrf.mxu0
        %v1403 = vadd.f32 0.0, %v1402
        %1404 = vdwg.mxu0
        %1405 = vmatpush.msra.mxu0 %v1149
        %1406 = vmatpush.msra.mxu0 %v1148
        %1407 = vmatpush.msra.mxu0 %v1147
        %1408 = vmatpush.msra.mxu0 %v1146
        %1409 = vmatpush.msra.mxu0 %v1145
        %1410 = vmatpush.msra.mxu0 %v1144
        %1411 = vmatpush.msra.mxu0 %v1143
        %1412 = vmatpush.msra.mxu0 %v1142
        %1413 = vmatpush.msra.mxu0 %v1141
        %1414 = vmatpush.msra.mxu0 %v1140
        %1415 = vmatpush.msra.mxu0 %v1139
        %1416 = vmatpush.msra.mxu0 %v1138
        %1417 = vmatpush.msra.mxu0 %v1137
        %1418 = vmatpush.msra.mxu0 %v1136
        %1419 = vmatpush.msra.mxu0 %v1135
        %1420 = vmatpush.msra.mxu0 %v1134
        %1421 = vmatmul.f32.gmra.mxu0 %v425
        %v1422 = vpop.f32.mrf.mxu0
        %v1423 = vadd.f32 0.0, %v1422
        %1424 = vmatmul.f32.gmra.mxu0 %v426
        %v1425 = vpop.f32.mrf.mxu0
        %v1426 = vadd.f32 0.0, %v1425
        %1427 = vdwg.mxu0
        %1428 = vmatpush.msra.mxu0 %v1261
        %1429 = vmatpush.msra.mxu0 %v1260
        %1430 = vmatpush.msra.mxu0 %v1259
        %1431 = vmatpush.msra.mxu0 %v1258
        %1432 = vmatpush.msra.mxu0 %v1257
        %1433 = vmatpush.msra.mxu0 %v1256
        %1434 = vmatpush.msra.mxu0 %v1255
        %1435 = vmatpush.msra.mxu0 %v1254
        %1436 = vmatpush.msra.mxu0 %v1253
        %1437 = vmatpush.msra.mxu0 %v1252
        %1438 = vmatpush.msra.mxu0 %v1251
        %1439 = vmatpush.msra.mxu0 %v1250
        %1440 = vmatpush.msra.mxu0 %v1249
        %1441 = vmatpush.msra.mxu0 %v1248
        %1442 = vmatpush.msra.mxu0 %v1247
        %1443 = vmatpush.msra.mxu0 %v1246
        %1444 = vmatmul.f32.gmra.mxu0 %v425
        %v1445 = vpop.f32.mrf.mxu0
        %v1446 = vadd.f32 0.0, %v1445
        %1447 = vmatmul.f32.gmra.mxu0 %v426
        %v1448 = vpop.f32.mrf.mxu0
        %v1449 = vadd.f32 0.0, %v1448
        %1450 = vdwg.mxu0
        %1451 = vmatpush.msra.mxu0 %v1373
        %1452 = vmatpush.msra.mxu0 %v1372
        %1453 = vmatpush.msra.mxu0 %v1371
        %1454 = vmatpush.msra.mxu0 %v1370
        %1455 = vmatpush.msra.mxu0 %v1369
        %1456 = vmatpush.msra.mxu0 %v1368
        %1457 = vmatpush.msra.mxu0 %v1367
        %1458 = vmatpush.msra.mxu0 %v1366
        %1459 = vmatpush.msra.mxu0 %v1365
        %1460 = vmatpush.msra.mxu0 %v1364
        %1461 = vmatpush.msra.mxu0 %v1363
        %1462 = vmatpush.msra.mxu0 %v1362
        %1463 = vmatpush.msra.mxu0 %v1361
        %1464 = vmatpush.msra.mxu0 %v1360
        %1465 = vmatpush.msra.mxu0 %v1359
        %1466 = vmatpush.msra.mxu0 %v1358
        %1467 = vmatmul.f32.gmra.mxu0 %v425
        %v1468 = vpop.f32.mrf.mxu0
        %v1469 = vadd.f32 0.0, %v1468
        %1470 = vmatmul.f32.gmra.mxu0 %v426
        %v1471 = vpop.f32.mrf.mxu0
        %v1472 = vadd.f32 0.0, %v1471
        %1473 = vdwg.mxu0
        %v1474 = vadd.f32 %v1374, %v1400
        %v1475 = vadd.f32 %v1375, %v1423
        %v1476 = vadd.f32 %v1376, %v1446
        %v1477 = vadd.f32 %v1377, %v1469
        %v1478 = vadd.f32 %v1378, %v1403
        %v1479 = vadd.f32 %v1379, %v1426
        %v1480 = vadd.f32 %v1380, %v1449
        %v1481 = vadd.f32 %v1381, %v1472
        %1482 = vst [vmem:[#allocation10] sm:$0xff] %v1474
        %1483 = vst [vmem:[#allocation10 + $0x8] sm:$0xff] %v1475
        %1484 = vst [vmem:[#allocation10 + $0x10] sm:$0xff] %v1476
        %1485 = vst [vmem:[#allocation10 + $0x18] sm:$0xff] %v1477
        %1486 = vst [vmem:[#allocation10 + $0x20] sm:$0xff] %v1478
        %1487 = vst [vmem:[#allocation10 + $0x28] sm:$0xff] %v1479
        %1488 = vst [vmem:[#allocation10 + $0x30] sm:$0xff] %v1480
        %1489 = vst [vmem:[#allocation10 + $0x38] sm:$0xff] %v1481
        // Predicated region
        $region61: #{tpu_custom_call.1} parent=39 // pred_check
          %p1490 = pneg %p195
        $region62: #{tpu_custom_call.1} parent=39 // pred_check_branch
          %1492 = sbr.rel (%p1490) target = $region64
        $region63: #{tpu_custom_call.1} parent=39 // pred_region
          %1494 = vsyncadd [#allocation4], 0
          %s1495 = smul.addr %s28, 8
          %s1496 = smul.addr %s1495, 8
          %s1497 = scalar_lea.hbm %s5, %s1496
          %s1498 = sshll.u32 [#allocation10], 4
          %s1499 = int_to_ptr.vmem [resolvable:$true] %s1498
          %s1500 = sshll.u32 %s1497, 4
          %s1501 = int_to_ptr.hbm [resolvable:$true] %s1500
          %1506 = dma.vmem_to_hbm [thread:$0]  %s1499, 1024, %s1501, [#allocation4], 512, 512, 32
        $region64: #{tpu_custom_call.1} parent=39 // pred_fallthru
          _
        // Predicated region
        $region65: #{tpu_custom_call.1} parent=39 // pred_check
          %p1507 = pneg %p195
        $region66: #{tpu_custom_call.1} parent=39 // pred_check_branch
          %1509 = sbr.rel (%p1507) target = $region68
        $region67: #{tpu_custom_call.1} parent=39 // pred_region
          %1511 = dma.done [#allocation4], 1024
        $region68: #{tpu_custom_call.1} parent=39 // pred_fallthru
          _
      $region40: #{tpu_custom_call.1} parent=5 // pred_fallthru
        _
      %p1512 = scmp.le.s32.totalorder 2, %s19
      // Predicated region
      $region69: #{tpu_custom_call.1} parent=5 // pred_check
        %p1513 = pneg %p1512
      $region70: #{tpu_custom_call.1} parent=5 // pred_check_branch
        %1515 = sbr.rel (%p1513) target = $region72
      $region71: #{tpu_custom_call.1} parent=5 // pred_region
        %s1516 = ssub.s32 %s19, 2
      $region72: #{tpu_custom_call.1} parent=5 // pred_fallthru
        _
    $region6: #{tpu_custom_call.1} parent=1 // loop_footer
      %s23 = sadd.s32 1, %s19
    $region7: #{tpu_custom_call.1} parent=1 // loop_footer_branch
      %18 = sbr.rel target = $region3
    $region8: #{tpu_custom_call.1} parent=1 // loop_exit
      _
    %1517 = vsyncpa [#allocation3], 1
    %s1518 = scalar_lea.sflag [#allocation3], 1
    %1519 = vsyncpa %s1518, 1
    %1520 = vsyncpa [#allocation6], 1
    %s1521 = scalar_lea.sflag [#allocation6], 1
    %1522 = vsyncpa %s1521, 1
    %1523 = vsyncpa [#allocation9], 1
    %s1524 = scalar_lea.sflag [#allocation9], 1
    %1525 = vsyncpa %s1524, 1
    %1526 = vsyncpa [#allocation4], 1
    %s1527 = scalar_lea.sflag [#allocation4], 1
    %1528 = vsyncpa %s1527, 1

</llo_original>
